<compile_context>
chip_gen: v6e
topology: v6e:2x2x1
jax: 0.10.0
libtpu: 0.0.40
codegen_flags: <defaults>
</compile_context>

<pallas_src>
import functools

import jax
import jax.numpy as jnp
import numpy as np
from jax.experimental import pallas as pl
from jax.experimental.pallas import tpu as pltpu


# ----------------------------------------------------------------------------
# Pallas kernel: one grid step == one time chunk of BOTH stacked LSTM layers.
# ----------------------------------------------------------------------------
def _encoder_chunk_kernel(xp_ref,     # (Tc, B, 4H)  precomputed x @ Wih1^T + b1, time-major
                          wrec_ref,   # (H+E, 4H+4E) block-diag(Whh1^T, Whh2^T)
                          wih2_ref,   # (H, 4E)      layer-2 input weights, pre-transposed
                          b2_ref,     # (1, 4E)      layer-2 combined bias
                          y_ref,      # (Tc, B, E)   layer-2 hidden outputs for this chunk
                          h1_ref, c1_ref,            # (B, H) persistent state scratch
                          h2_ref, c2_ref,            # (B, E) persistent state scratch
                          *, unroll):
    chunk = pl.program_id(0)

    @pl.when(chunk == 0)
    def _init():
        h1_ref[...] = jnp.zeros_like(h1_ref)
        c1_ref[...] = jnp.zeros_like(c1_ref)
        h2_ref[...] = jnp.zeros_like(h2_ref)
        c2_ref[...] = jnp.zeros_like(c2_ref)

    Tc = xp_ref.shape[0]
    H = h1_ref.shape[-1]

    # Loop-invariant weights: load once, reuse across the unrolled time loop.
    w_rec = wrec_ref[...]
    w_ih2 = wih2_ref[...]
    b2 = b2_ref[...]

    def step(t, carry):
        h1, c1, h2, c2 = carry

        # Fused recurrent projection for BOTH layers (block-diagonal weight).
        # Depends only on step t-1 state, so this single MXU op can be issued
        # before the activation math of step t.
        rec = jnp.dot(jnp.concatenate([h1, h2], axis=-1), w_rec,
                      preferred_element_type=jnp.float32)          # (B, 4H+4E)

        # ---- layer 1 (rnn1): gates = (x@Wih1 + b1)[t]  +  h1_prev@Whh1 ------
        gates1 = xp_ref[t] + rec[:, : 4 * H]
        i1 = jax.nn.sigmoid(gates1[:, 0 * H:1 * H])
        f1 = jax.nn.sigmoid(gates1[:, 1 * H:2 * H])
        g1 = jnp.tanh(gates1[:, 2 * H:3 * H])
        o1 = jax.nn.sigmoid(gates1[:, 3 * H:4 * H])
        c1n = f1 * c1 + i1 * g1
        h1n = o1 * jnp.tanh(c1n)

        # ---- layer 2 (rnn2): gates = h1_new@Wih2 + b2 + h2_prev@Whh2 --------
        E = h2.shape[-1]
        gates2 = (jnp.dot(h1n, w_ih2, preferred_element_type=jnp.float32)
                  + rec[:, 4 * H:] + b2)
        i2 = jax.nn.sigmoid(gates2[:, 0 * E:1 * E])
        f2 = jax.nn.sigmoid(gates2[:, 1 * E:2 * E])
        g2 = jnp.tanh(gates2[:, 2 * E:3 * E])
        o2 = jax.nn.sigmoid(gates2[:, 3 * E:4 * E])
        c2n = f2 * c2 + i2 * g2
        h2n = o2 * jnp.tanh(c2n)

        y_ref[t] = h2n          # leading-axis dynamic store into the chunk block
        return (h1n, c1n, h2n, c2n)

    carry0 = (h1_ref[...], c1_ref[...], h2_ref[...], c2_ref[...])
    h1f, c1f, h2f, c2f = jax.lax.fori_loop(0, Tc, step, carry0, unroll=unroll)

    # Persist recurrent state for the next time chunk.
    h1_ref[...] = h1f
    c1_ref[...] = c1f
    h2_ref[...] = h2f
    c2_ref[...] = c2f


def encoder_forward(x, params, *, time_chunk=256):
    """x: (B, T, F) float32.  Returns (B, T, E) float32 — full rnn2 output sequence."""
    wih1, whh1, b1, wih2, whh2, b2 = params
    B, T, F = x.shape
    H = whh1.shape[0]            # hidden_dim = 2 * embedding_dim
    E = whh2.shape[0]            # embedding_dim

    # ---- Hoisted, time-independent layer-1 input projection: one big matmul,
    # emitted time-major (no separate transpose pass over x).
    xproj = jnp.einsum('btf,fg->tbg', x, wih1,
                       precision=jax.lax.Precision.HIGHEST) + b1    # (T, B, 4H)

    # ---- Fused block-diagonal recurrent weight for both layers.
    w_rec = jnp.zeros((H + E, 4 * H + 4 * E), jnp.float32)
    w_rec = w_rec.at[:H, :4 * H].set(whh1)
    w_rec = w_rec.at[H:, 4 * H:].set(whh2)

    # ---- Time chunking: sequential grid over chunks, unrolled loop inside.
    Tc = min(T, time_chunk)
    n_chunks = pl.cdiv(T, Tc)
    T_pad = n_chunks * Tc
    if T_pad != T:
        # Padded steps produce bounded garbage state after the real sequence
        # ends; their outputs are sliced off below and affect nothing.
        xproj = jnp.pad(xproj, ((0, T_pad - T), (0, 0), (0, 0)))
    unroll = Tc if Tc <= 16 else 8

    grid_spec = pltpu.PrefetchScalarGridSpec(
        num_scalar_prefetch=0,
        grid=(n_chunks,),
        in_specs=[
            pl.BlockSpec((Tc, B, 4 * H), lambda c: (c, 0, 0)),          # xproj chunk
            pl.BlockSpec((H + E, 4 * H + 4 * E), lambda c: (0, 0)),     # w_rec
            pl.BlockSpec((H, 4 * E), lambda c: (0, 0)),                 # wih2^T
            pl.BlockSpec((1, 4 * E), lambda c: (0, 0)),                 # b2
        ],
        out_specs=pl.BlockSpec((Tc, B, E), lambda c: (c, 0, 0)),
        scratch_shapes=[
            pltpu.VMEM((B, H), jnp.float32),  # h1
            pltpu.VMEM((B, H), jnp.float32),  # c1
            pltpu.VMEM((B, E), jnp.float32),  # h2
            pltpu.VMEM((B, E), jnp.float32),  # c2
        ],
    )

    y_tm = pl.pallas_call(
        functools.partial(_encoder_chunk_kernel, unroll=unroll),
        out_shape=jax.ShapeDtypeStruct((T_pad, B, E), jnp.float32),
        grid_spec=grid_spec,
        compiler_params=pltpu.CompilerParams(
            dimension_semantics=("arbitrary",)),   # recurrence: must run sequentially
    )(xproj, w_rec, wih2, b2)

    # (T, B, E) -> (B, T, E) to match batch_first=True module output.
    return jnp.transpose(y_tm[:T], (1, 0, 2))


# ----------------------------------------------------------------------------
# Pure-JAX reference (mirrors torch.nn.LSTM semantics) for correctness check.
# ----------------------------------------------------------------------------
def _lstm_ref(x, wih_T, whh_T, b):
    B, T, F = x.shape
    H = whh_T.shape[0]

    def step(carry, x_t):
        h, c = carry
        g = (jnp.dot(x_t, wih_T, precision=jax.lax.Precision.HIGHEST)
             + jnp.dot(h, whh_T, precision=jax.lax.Precision.HIGHEST) + b)
        i = jax.nn.sigmoid(g[:, 0 * H:1 * H])
        f = jax.nn.sigmoid(g[:, 1 * H:2 * H])
        gg = jnp.tanh(g[:, 2 * H:3 * H])
        o = jax.nn.sigmoid(g[:, 3 * H:4 * H])
        c = f * c + i * gg
        h = o * jnp.tanh(c)
        return (h, c), h

    init = (jnp.zeros((B, H), jnp.float32), jnp.zeros((B, H), jnp.float32))
    _, ys = jax.lax.scan(step, init, jnp.transpose(x, (1, 0, 2)))
    return jnp.transpose(ys, (1, 0, 2))


def encoder_ref(x, params):
    wih1, whh1, b1, wih2, whh2, b2 = params
    h = _lstm_ref(x, wih1, whh1, b1)
    return _lstm_ref(h, wih2, whh2, b2)


# ----------------------------------------------------------------------------
# Deterministic parameter init (same shapes as nn.LSTM: W_ih (4H,F), W_hh (4H,H),
# b_ih (4H,), b_hh (4H,); biases combined, weights pre-transposed for the kernel).
# ----------------------------------------------------------------------------
def init_params(key, n_features, embedding_dim):
    hidden_dim = 2 * embedding_dim
    ks = jax.random.split(key, 8)

    def u(k, shape, bound):
        return jax.random.uniform(k, shape, jnp.float32, -bound, bound)

    k1 = 1.0 / np.sqrt(hidden_dim)
    wih1 = u(ks[0], (4 * hidden_dim, n_features), k1).T          # (F, 4H)
    whh1 = u(ks[1], (4 * hidden_dim, hidden_dim), k1).T          # (H, 4H)
    b1 = (u(ks[2], (4 * hidden_dim,), k1)
          + u(ks[3], (4 * hidden_dim,), k1)).reshape(1, -1)      # (1, 4H)

    k2 = 1.0 / np.sqrt(embedding_dim)
    wih2 = u(ks[4], (4 * embedding_dim, hidden_dim), k2).T       # (H, 4E)
    whh2 = u(ks[5], (4 * embedding_dim, embedding_dim), k2).T    # (E, 4E)
    b2 = (u(ks[6], (4 * embedding_dim,), k2)
          + u(ks[7], (4 * embedding_dim,), k2)).reshape(1, -1)   # (1, 4E)

    return (wih1, whh1, b1, wih2, whh2, b2)


if __name__ == "__main__":
    batch, seq_len, n_features, embedding_dim = 2, 8, 4, 16

    key = jax.random.PRNGKey(0)
    k_x, k_p = jax.random.split(key)
    x = jax.random.normal(k_x, (batch, seq_len, n_features), jnp.float32)
    params = init_params(k_p, n_features, embedding_dim)

    y = encoder_forward(x, params)
    y = jax.block_until_ready(y)

    y_ref = jax.block_until_ready(encoder_ref(x, params))

    assert y.shape == (batch, seq_len, embedding_dim), y.shape
    np.testing.assert_allclose(np.asarray(y), np.asarray(y_ref), rtol=2e-3, atol=2e-3)

    print("KERNEL_OK")
</pallas_src>

<mosaic_0001>
module attributes {stable_mosaic.version = 11 : i64} {
  func.func @_encoder_chunk_kernel(%arg0: i32, %arg1: memref<8x2x128xf32, #tpu.memory_space<vmem>>, %arg2: memref<48x192xf32, #tpu.memory_space<vmem>>, %arg3: memref<32x64xf32, #tpu.memory_space<vmem>>, %arg4: memref<1x64xf32, #tpu.memory_space<vmem>>, %arg5: memref<8x2x16xf32, #tpu.memory_space<vmem>>, %arg6: memref<2x32xf32, #tpu.memory_space<vmem>>, %arg7: memref<2x32xf32, #tpu.memory_space<vmem>>, %arg8: memref<2x16xf32, #tpu.memory_space<vmem>>, %arg9: memref<2x16xf32, #tpu.memory_space<vmem>>) attributes {dimension_semantics = [#tpu.dimension_semantics<arbitrary>], iteration_bounds = array<i64: 1>, scalar_prefetch = 0 : i64, scratch_operands = 4 : i64, tpu.core_type = #tpu.core_type<tc>, window_params = [{transform_indices = @transform_0, window_bounds = array<i64: 8, 2, 128>}, {pipeline_mode = #tpu.pipeline_mode<synchronous>, transform_indices = @transform_1, window_bounds = array<i64: 48, 192>}, {pipeline_mode = #tpu.pipeline_mode<synchronous>, transform_indices = @transform_2, window_bounds = array<i64: 32, 64>}, {pipeline_mode = #tpu.pipeline_mode<synchronous>, transform_indices = @transform_3, window_bounds = array<i64: 1, 64>}, {transform_indices = @transform_4, window_bounds = array<i64: 8, 2, 16>}]} {
    %c0_i32 = arith.constant 0 : i32
    %0 = arith.cmpi eq, %arg0, %c0_i32 : i32
    %1 = arith.extui %0 : i1 to i32
    %c0_i32_0 = arith.constant 0 : i32
    %2 = arith.cmpi ne, %1, %c0_i32_0 : i32
    scf.if %2 {
      %cst_118 = arith.constant 0.000000e+00 : f32
      %542 = vector.broadcast %cst_118 : f32 to vector<2x32xf32>
      %c0_119 = arith.constant 0 : index
      %c0_120 = arith.constant 0 : index
      %543 = vector.load %arg6[%c0_119, %c0_120] : memref<2x32xf32, #tpu.memory_space<vmem>>, vector<2x32xf32>
      tpu.vector_store %arg6[%c0_119, %c0_120], %542 {strides = array<i32>} : memref<2x32xf32, #tpu.memory_space<vmem>>, vector<2x32xf32>,
      %cst_121 = arith.constant 0.000000e+00 : f32
      %544 = vector.broadcast %cst_121 : f32 to vector<2x32xf32>
      %c0_122 = arith.constant 0 : index
      %c0_123 = arith.constant 0 : index
      %545 = vector.load %arg7[%c0_122, %c0_123] : memref<2x32xf32, #tpu.memory_space<vmem>>, vector<2x32xf32>
      tpu.vector_store %arg7[%c0_122, %c0_123], %544 {strides = array<i32>} : memref<2x32xf32, #tpu.memory_space<vmem>>, vector<2x32xf32>,
      %cst_124 = arith.constant 0.000000e+00 : f32
      %546 = vector.broadcast %cst_124 : f32 to vector<2x16xf32>
      %c0_125 = arith.constant 0 : index
      %c0_126 = arith.constant 0 : index
      %547 = vector.load %arg8[%c0_125, %c0_126] : memref<2x16xf32, #tpu.memory_space<vmem>>, vector<2x16xf32>
      tpu.vector_store %arg8[%c0_125, %c0_126], %546 {strides = array<i32>} : memref<2x16xf32, #tpu.memory_space<vmem>>, vector<2x16xf32>,
      %cst_127 = arith.constant 0.000000e+00 : f32
      %548 = vector.broadcast %cst_127 : f32 to vector<2x16xf32>
      %c0_128 = arith.constant 0 : index
      %c0_129 = arith.constant 0 : index
      %549 = vector.load %arg9[%c0_128, %c0_129] : memref<2x16xf32, #tpu.memory_space<vmem>>, vector<2x16xf32>
      tpu.vector_store %arg9[%c0_128, %c0_129], %548 {strides = array<i32>} : memref<2x16xf32, #tpu.memory_space<vmem>>, vector<2x16xf32>,
    } else {
    }
    %c0 = arith.constant 0 : index
    %c0_1 = arith.constant 0 : index
    %3 = vector.load %arg2[%c0, %c0_1] : memref<48x192xf32, #tpu.memory_space<vmem>>, vector<48x192xf32>
    %c0_2 = arith.constant 0 : index
    %c0_3 = arith.constant 0 : index
    %4 = vector.load %arg3[%c0_2, %c0_3] : memref<32x64xf32, #tpu.memory_space<vmem>>, vector<32x64xf32>
    %c0_4 = arith.constant 0 : index
    %c0_5 = arith.constant 0 : index
    %5 = vector.load %arg4[%c0_4, %c0_5] : memref<1x64xf32, #tpu.memory_space<vmem>>, vector<1x64xf32>
    %c0_6 = arith.constant 0 : index
    %c0_7 = arith.constant 0 : index
    %6 = vector.load %arg6[%c0_6, %c0_7] : memref<2x32xf32, #tpu.memory_space<vmem>>, vector<2x32xf32>
    %c0_8 = arith.constant 0 : index
    %c0_9 = arith.constant 0 : index
    %7 = vector.load %arg7[%c0_8, %c0_9] : memref<2x32xf32, #tpu.memory_space<vmem>>, vector<2x32xf32>
    %c0_10 = arith.constant 0 : index
    %c0_11 = arith.constant 0 : index
    %8 = vector.load %arg8[%c0_10, %c0_11] : memref<2x16xf32, #tpu.memory_space<vmem>>, vector<2x16xf32>
    %c0_12 = arith.constant 0 : index
    %c0_13 = arith.constant 0 : index
    %9 = vector.load %arg9[%c0_12, %c0_13] : memref<2x16xf32, #tpu.memory_space<vmem>>, vector<2x16xf32>
    %c0_i32_14 = arith.constant 0 : i32
    %10 = tpu.concatenate %6, %8 in 1 : vector<2x32xf32>, vector<2x16xf32> -> vector<2x48xf32>
    %cst = arith.constant dense<0.000000e+00> : vector<2x192xf32>
    %11 = tpu.matmul %10, %3, %cst {dimension_numbers = #tpu.dot_dimension_numbers<[1], [0], [0], [1], [0, 0, 1, 1], [], []>} : vector<2x48xf32>, vector<48x192xf32>, vector<2x192xf32> -> vector<2x192xf32>
    %12 = arith.index_cast %c0_i32_14 : i32 to index
    %c0_15 = arith.constant 0 : index
    %c0_16 = arith.constant 0 : index
    %13 = vector.load %arg1[%12, %c0_15, %c0_16] : memref<8x2x128xf32, #tpu.memory_space<vmem>>, vector<1x2x128xf32>
    %14 = vector.shape_cast %13 : vector<1x2x128xf32> to vector<2x128xf32>
    %15 = vector.extract_strided_slice %11 {offsets = [0, 0], sizes = [2, 128], strides = [1, 1]} : vector<2x192xf32> to vector<2x128xf32>
    %16 = arith.addf %14, %15 : vector<2x128xf32>
    %17 = vector.extract_strided_slice %16 {offsets = [0, 0], sizes = [2, 32], strides = [1, 1]} : vector<2x128xf32> to vector<2x32xf32>
    %18 = arith.negf %17 : vector<2x32xf32>
    %19 = math.exp %18 : vector<2x32xf32>
    %cst_17 = arith.constant 1.000000e+00 : f32
    %20 = vector.broadcast %cst_17 : f32 to vector<2x32xf32>
    %21 = arith.addf %20, %19 : vector<2x32xf32>
    %22 = arith.divf %20, %21 : vector<2x32xf32>
    %23 = vector.extract_strided_slice %16 {offsets = [0, 32], sizes = [2, 32], strides = [1, 1]} : vector<2x128xf32> to vector<2x32xf32>
    %24 = arith.negf %23 : vector<2x32xf32>
    %25 = math.exp %24 : vector<2x32xf32>
    %cst_18 = arith.constant 1.000000e+00 : f32
    %26 = vector.broadcast %cst_18 : f32 to vector<2x32xf32>
    %27 = arith.addf %26, %25 : vector<2x32xf32>
    %28 = arith.divf %26, %27 : vector<2x32xf32>
    %29 = vector.extract_strided_slice %16 {offsets = [0, 64], sizes = [2, 32], strides = [1, 1]} : vector<2x128xf32> to vector<2x32xf32>
    %30 = math.tanh %29 : vector<2x32xf32>
    %31 = vector.extract_strided_slice %16 {offsets = [0, 96], sizes = [2, 32], strides = [1, 1]} : vector<2x128xf32> to vector<2x32xf32>
    %32 = arith.negf %31 : vector<2x32xf32>
    %33 = math.exp %32 : vector<2x32xf32>
    %cst_19 = arith.constant 1.000000e+00 : f32
    %34 = vector.broadcast %cst_19 : f32 to vector<2x32xf32>
    %35 = arith.addf %34, %33 : vector<2x32xf32>
    %36 = arith.divf %34, %35 : vector<2x32xf32>
    %37 = arith.mulf %28, %7 : vector<2x32xf32>
    %38 = arith.mulf %22, %30 : vector<2x32xf32>
    %39 = arith.addf %37, %38 : vector<2x32xf32>
    %40 = math.tanh %39 : vector<2x32xf32>
    %41 = arith.mulf %36, %40 : vector<2x32xf32>
    %cst_20 = arith.constant dense<0.000000e+00> : vector<2x64xf32>
    %42 = tpu.matmul %41, %4, %cst_20 {dimension_numbers = #tpu.dot_dimension_numbers<[1], [0], [0], [1], [0, 0, 1, 1], [], []>} : vector<2x32xf32>, vector<32x64xf32>, vector<2x64xf32> -> vector<2x64xf32>
    %43 = vector.extract_strided_slice %11 {offsets = [0, 128], sizes = [2, 64], strides = [1, 1]} : vector<2x192xf32> to vector<2x64xf32>
    %44 = arith.addf %42, %43 : vector<2x64xf32>
    %45 = vector.broadcast %5 : vector<1x64xf32> to vector<2x64xf32>
    %46 = arith.addf %44, %45 : vector<2x64xf32>
    %47 = vector.extract_strided_slice %46 {offsets = [0, 0], sizes = [2, 16], strides = [1, 1]} : vector<2x64xf32> to vector<2x16xf32>
    %48 = arith.negf %47 : vector<2x16xf32>
    %49 = math.exp %48 : vector<2x16xf32>
    %cst_21 = arith.constant 1.000000e+00 : f32
    %50 = vector.broadcast %cst_21 : f32 to vector<2x16xf32>
    %51 = arith.addf %50, %49 : vector<2x16xf32>
    %52 = arith.divf %50, %51 : vector<2x16xf32>
    %53 = vector.extract_strided_slice %46 {offsets = [0, 16], sizes = [2, 16], strides = [1, 1]} : vector<2x64xf32> to vector<2x16xf32>
    %54 = arith.negf %53 : vector<2x16xf32>
    %55 = math.exp %54 : vector<2x16xf32>
    %cst_22 = arith.constant 1.000000e+00 : f32
    %56 = vector.broadcast %cst_22 : f32 to vector<2x16xf32>
    %57 = arith.addf %56, %55 : vector<2x16xf32>
    %58 = arith.divf %56, %57 : vector<2x16xf32>
    %59 = vector.extract_strided_slice %46 {offsets = [0, 32], sizes = [2, 16], strides = [1, 1]} : vector<2x64xf32> to vector<2x16xf32>
    %60 = math.tanh %59 : vector<2x16xf32>
    %61 = vector.extract_strided_slice %46 {offsets = [0, 48], sizes = [2, 16], strides = [1, 1]} : vector<2x64xf32> to vector<2x16xf32>
    %62 = arith.negf %61 : vector<2x16xf32>
    %63 = math.exp %62 : vector<2x16xf32>
    %cst_23 = arith.constant 1.000000e+00 : f32
    %64 = vector.broadcast %cst_23 : f32 to vector<2x16xf32>
    %65 = arith.addf %64, %63 : vector<2x16xf32>
    %66 = arith.divf %64, %65 : vector<2x16xf32>
    %67 = arith.mulf %58, %9 : vector<2x16xf32>
    %68 = arith.mulf %52, %60 : vector<2x16xf32>
    %69 = arith.addf %67, %68 : vector<2x16xf32>
    %70 = math.tanh %69 : vector<2x16xf32>
    %71 = arith.mulf %66, %70 : vector<2x16xf32>
    %72 = arith.index_cast %c0_i32_14 : i32 to index
    %c0_24 = arith.constant 0 : index
    %c0_25 = arith.constant 0 : index
    %73 = vector.load %arg5[%72, %c0_24, %c0_25] : memref<8x2x16xf32, #tpu.memory_space<vmem>>, vector<1x2x16xf32>
    %74 = vector.shape_cast %73 : vector<1x2x16xf32> to vector<2x16xf32>
    %75 = vector.shape_cast %71 : vector<2x16xf32> to vector<1x2x16xf32>
    tpu.vector_store %arg5[%72, %c0_24, %c0_25], %75 {strides = array<i32>} : memref<8x2x16xf32, #tpu.memory_space<vmem>>, vector<1x2x16xf32>,
    %c1_i32 = arith.constant 1 : i32
    %76 = tpu.concatenate %41, %71 in 1 : vector<2x32xf32>, vector<2x16xf32> -> vector<2x48xf32>
    %cst_26 = arith.constant dense<0.000000e+00> : vector<2x192xf32>
    %77 = tpu.matmul %76, %3, %cst_26 {dimension_numbers = #tpu.dot_dimension_numbers<[1], [0], [0], [1], [0, 0, 1, 1], [], []>} : vector<2x48xf32>, vector<48x192xf32>, vector<2x192xf32> -> vector<2x192xf32>
    %78 = arith.index_cast %c1_i32 : i32 to index
    %c0_27 = arith.constant 0 : index
    %c0_28 = arith.constant 0 : index
    %79 = vector.load %arg1[%78, %c0_27, %c0_28] : memref<8x2x128xf32, #tpu.memory_space<vmem>>, vector<1x2x128xf32>
    %80 = vector.shape_cast %79 : vector<1x2x128xf32> to vector<2x128xf32>
    %81 = vector.extract_strided_slice %77 {offsets = [0, 0], sizes = [2, 128], strides = [1, 1]} : vector<2x192xf32> to vector<2x128xf32>
    %82 = arith.addf %80, %81 : vector<2x128xf32>
    %83 = vector.extract_strided_slice %82 {offsets = [0, 0], sizes = [2, 32], strides = [1, 1]} : vector<2x128xf32> to vector<2x32xf32>
    %84 = arith.negf %83 : vector<2x32xf32>
    %85 = math.exp %84 : vector<2x32xf32>
    %cst_29 = arith.constant 1.000000e+00 : f32
    %86 = vector.broadcast %cst_29 : f32 to vector<2x32xf32>
    %87 = arith.addf %86, %85 : vector<2x32xf32>
    %88 = arith.divf %86, %87 : vector<2x32xf32>
    %89 = vector.extract_strided_slice %82 {offsets = [0, 32], sizes = [2, 32], strides = [1, 1]} : vector<2x128xf32> to vector<2x32xf32>
    %90 = arith.negf %89 : vector<2x32xf32>
    %91 = math.exp %90 : vector<2x32xf32>
    %cst_30 = arith.constant 1.000000e+00 : f32
    %92 = vector.broadcast %cst_30 : f32 to vector<2x32xf32>
    %93 = arith.addf %92, %91 : vector<2x32xf32>
    %94 = arith.divf %92, %93 : vector<2x32xf32>
    %95 = vector.extract_strided_slice %82 {offsets = [0, 64], sizes = [2, 32], strides = [1, 1]} : vector<2x128xf32> to vector<2x32xf32>
    %96 = math.tanh %95 : vector<2x32xf32>
    %97 = vector.extract_strided_slice %82 {offsets = [0, 96], sizes = [2, 32], strides = [1, 1]} : vector<2x128xf32> to vector<2x32xf32>
    %98 = arith.negf %97 : vector<2x32xf32>
    %99 = math.exp %98 : vector<2x32xf32>
    %cst_31 = arith.constant 1.000000e+00 : f32
    %100 = vector.broadcast %cst_31 : f32 to vector<2x32xf32>
    %101 = arith.addf %100, %99 : vector<2x32xf32>
    %102 = arith.divf %100, %101 : vector<2x32xf32>
    %103 = arith.mulf %94, %39 : vector<2x32xf32>
    %104 = arith.mulf %88, %96 : vector<2x32xf32>
    %105 = arith.addf %103, %104 : vector<2x32xf32>
    %106 = math.tanh %105 : vector<2x32xf32>
    %107 = arith.mulf %102, %106 : vector<2x32xf32>
    %cst_32 = arith.constant dense<0.000000e+00> : vector<2x64xf32>
    %108 = tpu.matmul %107, %4, %cst_32 {dimension_numbers = #tpu.dot_dimension_numbers<[1], [0], [0], [1], [0, 0, 1, 1], [], []>} : vector<2x32xf32>, vector<32x64xf32>, vector<2x64xf32> -> vector<2x64xf32>
    %109 = vector.extract_strided_slice %77 {offsets = [0, 128], sizes = [2, 64], strides = [1, 1]} : vector<2x192xf32> to vector<2x64xf32>
    %110 = arith.addf %108, %109 : vector<2x64xf32>
    %111 = vector.broadcast %5 : vector<1x64xf32> to vector<2x64xf32>
    %112 = arith.addf %110, %111 : vector<2x64xf32>
    %113 = vector.extract_strided_slice %112 {offsets = [0, 0], sizes = [2, 16], strides = [1, 1]} : vector<2x64xf32> to vector<2x16xf32>
    %114 = arith.negf %113 : vector<2x16xf32>
    %115 = math.exp %114 : vector<2x16xf32>
    %cst_33 = arith.constant 1.000000e+00 : f32
    %116 = vector.broadcast %cst_33 : f32 to vector<2x16xf32>
    %117 = arith.addf %116, %115 : vector<2x16xf32>
    %118 = arith.divf %116, %117 : vector<2x16xf32>
    %119 = vector.extract_strided_slice %112 {offsets = [0, 16], sizes = [2, 16], strides = [1, 1]} : vector<2x64xf32> to vector<2x16xf32>
    %120 = arith.negf %119 : vector<2x16xf32>
    %121 = math.exp %120 : vector<2x16xf32>
    %cst_34 = arith.constant 1.000000e+00 : f32
    %122 = vector.broadcast %cst_34 : f32 to vector<2x16xf32>
    %123 = arith.addf %122, %121 : vector<2x16xf32>
    %124 = arith.divf %122, %123 : vector<2x16xf32>
    %125 = vector.extract_strided_slice %112 {offsets = [0, 32], sizes = [2, 16], strides = [1, 1]} : vector<2x64xf32> to vector<2x16xf32>
    %126 = math.tanh %125 : vector<2x16xf32>
    %127 = vector.extract_strided_slice %112 {offsets = [0, 48], sizes = [2, 16], strides = [1, 1]} : vector<2x64xf32> to vector<2x16xf32>
    %128 = arith.negf %127 : vector<2x16xf32>
    %129 = math.exp %128 : vector<2x16xf32>
    %cst_35 = arith.constant 1.000000e+00 : f32
    %130 = vector.broadcast %cst_35 : f32 to vector<2x16xf32>
    %131 = arith.addf %130, %129 : vector<2x16xf32>
    %132 = arith.divf %130, %131 : vector<2x16xf32>
    %133 = arith.mulf %124, %69 : vector<2x16xf32>
    %134 = arith.mulf %118, %126 : vector<2x16xf32>
    %135 = arith.addf %133, %134 : vector<2x16xf32>
    %136 = math.tanh %135 : vector<2x16xf32>
    %137 = arith.mulf %132, %136 : vector<2x16xf32>
    %138 = arith.index_cast %c1_i32 : i32 to index
    %c0_36 = arith.constant 0 : index
    %c0_37 = arith.constant 0 : index
    %139 = vector.load %arg5[%138, %c0_36, %c0_37] : memref<8x2x16xf32, #tpu.memory_space<vmem>>, vector<1x2x16xf32>
    %140 = vector.shape_cast %139 : vector<1x2x16xf32> to vector<2x16xf32>
    %141 = vector.shape_cast %137 : vector<2x16xf32> to vector<1x2x16xf32>
    tpu.vector_store %arg5[%138, %c0_36, %c0_37], %141 {strides = array<i32>} : memref<8x2x16xf32, #tpu.memory_space<vmem>>, vector<1x2x16xf32>,
    %c2_i32 = arith.constant 2 : i32
    %142 = tpu.concatenate %107, %137 in 1 : vector<2x32xf32>, vector<2x16xf32> -> vector<2x48xf32>
    %cst_38 = arith.constant dense<0.000000e+00> : vector<2x192xf32>
    %143 = tpu.matmul %142, %3, %cst_38 {dimension_numbers = #tpu.dot_dimension_numbers<[1], [0], [0], [1], [0, 0, 1, 1], [], []>} : vector<2x48xf32>, vector<48x192xf32>, vector<2x192xf32> -> vector<2x192xf32>
    %144 = arith.index_cast %c2_i32 : i32 to index
    %c0_39 = arith.constant 0 : index
    %c0_40 = arith.constant 0 : index
    %145 = vector.load %arg1[%144, %c0_39, %c0_40] : memref<8x2x128xf32, #tpu.memory_space<vmem>>, vector<1x2x128xf32>
    %146 = vector.shape_cast %145 : vector<1x2x128xf32> to vector<2x128xf32>
    %147 = vector.extract_strided_slice %143 {offsets = [0, 0], sizes = [2, 128], strides = [1, 1]} : vector<2x192xf32> to vector<2x128xf32>
    %148 = arith.addf %146, %147 : vector<2x128xf32>
    %149 = vector.extract_strided_slice %148 {offsets = [0, 0], sizes = [2, 32], strides = [1, 1]} : vector<2x128xf32> to vector<2x32xf32>
    %150 = arith.negf %149 : vector<2x32xf32>
    %151 = math.exp %150 : vector<2x32xf32>
    %cst_41 = arith.constant 1.000000e+00 : f32
    %152 = vector.broadcast %cst_41 : f32 to vector<2x32xf32>
    %153 = arith.addf %152, %151 : vector<2x32xf32>
    %154 = arith.divf %152, %153 : vector<2x32xf32>
    %155 = vector.extract_strided_slice %148 {offsets = [0, 32], sizes = [2, 32], strides = [1, 1]} : vector<2x128xf32> to vector<2x32xf32>
    %156 = arith.negf %155 : vector<2x32xf32>
    %157 = math.exp %156 : vector<2x32xf32>
    %cst_42 = arith.constant 1.000000e+00 : f32
    %158 = vector.broadcast %cst_42 : f32 to vector<2x32xf32>
    %159 = arith.addf %158, %157 : vector<2x32xf32>
    %160 = arith.divf %158, %159 : vector<2x32xf32>
    %161 = vector.extract_strided_slice %148 {offsets = [0, 64], sizes = [2, 32], strides = [1, 1]} : vector<2x128xf32> to vector<2x32xf32>
    %162 = math.tanh %161 : vector<2x32xf32>
    %163 = vector.extract_strided_slice %148 {offsets = [0, 96], sizes = [2, 32], strides = [1, 1]} : vector<2x128xf32> to vector<2x32xf32>
    %164 = arith.negf %163 : vector<2x32xf32>
    %165 = math.exp %164 : vector<2x32xf32>
    %cst_43 = arith.constant 1.000000e+00 : f32
    %166 = vector.broadcast %cst_43 : f32 to vector<2x32xf32>
    %167 = arith.addf %166, %165 : vector<2x32xf32>
    %168 = arith.divf %166, %167 : vector<2x32xf32>
    %169 = arith.mulf %160, %105 : vector<2x32xf32>
    %170 = arith.mulf %154, %162 : vector<2x32xf32>
    %171 = arith.addf %169, %170 : vector<2x32xf32>
    %172 = math.tanh %171 : vector<2x32xf32>
    %173 = arith.mulf %168, %172 : vector<2x32xf32>
    %cst_44 = arith.constant dense<0.000000e+00> : vector<2x64xf32>
    %174 = tpu.matmul %173, %4, %cst_44 {dimension_numbers = #tpu.dot_dimension_numbers<[1], [0], [0], [1], [0, 0, 1, 1], [], []>} : vector<2x32xf32>, vector<32x64xf32>, vector<2x64xf32> -> vector<2x64xf32>
    %175 = vector.extract_strided_slice %143 {offsets = [0, 128], sizes = [2, 64], strides = [1, 1]} : vector<2x192xf32> to vector<2x64xf32>
    %176 = arith.addf %174, %175 : vector<2x64xf32>
    %177 = vector.broadcast %5 : vector<1x64xf32> to vector<2x64xf32>
    %178 = arith.addf %176, %177 : vector<2x64xf32>
    %179 = vector.extract_strided_slice %178 {offsets = [0, 0], sizes = [2, 16], strides = [1, 1]} : vector<2x64xf32> to vector<2x16xf32>
    %180 = arith.negf %179 : vector<2x16xf32>
    %181 = math.exp %180 : vector<2x16xf32>
    %cst_45 = arith.constant 1.000000e+00 : f32
    %182 = vector.broadcast %cst_45 : f32 to vector<2x16xf32>
    %183 = arith.addf %182, %181 : vector<2x16xf32>
    %184 = arith.divf %182, %183 : vector<2x16xf32>
    %185 = vector.extract_strided_slice %178 {offsets = [0, 16], sizes = [2, 16], strides = [1, 1]} : vector<2x64xf32> to vector<2x16xf32>
    %186 = arith.negf %185 : vector<2x16xf32>
    %187 = math.exp %186 : vector<2x16xf32>
    %cst_46 = arith.constant 1.000000e+00 : f32
    %188 = vector.broadcast %cst_46 : f32 to vector<2x16xf32>
    %189 = arith.addf %188, %187 : vector<2x16xf32>
    %190 = arith.divf %188, %189 : vector<2x16xf32>
    %191 = vector.extract_strided_slice %178 {offsets = [0, 32], sizes = [2, 16], strides = [1, 1]} : vector<2x64xf32> to vector<2x16xf32>
    %192 = math.tanh %191 : vector<2x16xf32>
    %193 = vector.extract_strided_slice %178 {offsets = [0, 48], sizes = [2, 16], strides = [1, 1]} : vector<2x64xf32> to vector<2x16xf32>
    %194 = arith.negf %193 : vector<2x16xf32>
    %195 = math.exp %194 : vector<2x16xf32>
    %cst_47 = arith.constant 1.000000e+00 : f32
    %196 = vector.broadcast %cst_47 : f32 to vector<2x16xf32>
    %197 = arith.addf %196, %195 : vector<2x16xf32>
    %198 = arith.divf %196, %197 : vector<2x16xf32>
    %199 = arith.mulf %190, %135 : vector<2x16xf32>
    %200 = arith.mulf %184, %192 : vector<2x16xf32>
    %201 = arith.addf %199, %200 : vector<2x16xf32>
    %202 = math.tanh %201 : vector<2x16xf32>
    %203 = arith.mulf %198, %202 : vector<2x16xf32>
    %204 = arith.index_cast %c2_i32 : i32 to index
    %c0_48 = arith.constant 0 : index
    %c0_49 = arith.constant 0 : index
    %205 = vector.load %arg5[%204, %c0_48, %c0_49] : memref<8x2x16xf32, #tpu.memory_space<vmem>>, vector<1x2x16xf32>
    %206 = vector.shape_cast %205 : vector<1x2x16xf32> to vector<2x16xf32>
    %207 = vector.shape_cast %203 : vector<2x16xf32> to vector<1x2x16xf32>
    tpu.vector_store %arg5[%204, %c0_48, %c0_49], %207 {strides = array<i32>} : memref<8x2x16xf32, #tpu.memory_space<vmem>>, vector<1x2x16xf32>,
    %c3_i32 = arith.constant 3 : i32
    %208 = tpu.concatenate %173, %203 in 1 : vector<2x32xf32>, vector<2x16xf32> -> vector<2x48xf32>
    %cst_50 = arith.constant dense<0.000000e+00> : vector<2x192xf32>
    %209 = tpu.matmul %208, %3, %cst_50 {dimension_numbers = #tpu.dot_dimension_numbers<[1], [0], [0], [1], [0, 0, 1, 1], [], []>} : vector<2x48xf32>, vector<48x192xf32>, vector<2x192xf32> -> vector<2x192xf32>
    %210 = arith.index_cast %c3_i32 : i32 to index
    %c0_51 = arith.constant 0 : index
    %c0_52 = arith.constant 0 : index
    %211 = vector.load %arg1[%210, %c0_51, %c0_52] : memref<8x2x128xf32, #tpu.memory_space<vmem>>, vector<1x2x128xf32>
    %212 = vector.shape_cast %211 : vector<1x2x128xf32> to vector<2x128xf32>
    %213 = vector.extract_strided_slice %209 {offsets = [0, 0], sizes = [2, 128], strides = [1, 1]} : vector<2x192xf32> to vector<2x128xf32>
    %214 = arith.addf %212, %213 : vector<2x128xf32>
    %215 = vector.extract_strided_slice %214 {offsets = [0, 0], sizes = [2, 32], strides = [1, 1]} : vector<2x128xf32> to vector<2x32xf32>
    %216 = arith.negf %215 : vector<2x32xf32>
    %217 = math.exp %216 : vector<2x32xf32>
    %cst_53 = arith.constant 1.000000e+00 : f32
    %218 = vector.broadcast %cst_53 : f32 to vector<2x32xf32>
    %219 = arith.addf %218, %217 : vector<2x32xf32>
    %220 = arith.divf %218, %219 : vector<2x32xf32>
    %221 = vector.extract_strided_slice %214 {offsets = [0, 32], sizes = [2, 32], strides = [1, 1]} : vector<2x128xf32> to vector<2x32xf32>
    %222 = arith.negf %221 : vector<2x32xf32>
    %223 = math.exp %222 : vector<2x32xf32>
    %cst_54 = arith.constant 1.000000e+00 : f32
    %224 = vector.broadcast %cst_54 : f32 to vector<2x32xf32>
    %225 = arith.addf %224, %223 : vector<2x32xf32>
    %226 = arith.divf %224, %225 : vector<2x32xf32>
    %227 = vector.extract_strided_slice %214 {offsets = [0, 64], sizes = [2, 32], strides = [1, 1]} : vector<2x128xf32> to vector<2x32xf32>
    %228 = math.tanh %227 : vector<2x32xf32>
    %229 = vector.extract_strided_slice %214 {offsets = [0, 96], sizes = [2, 32], strides = [1, 1]} : vector<2x128xf32> to vector<2x32xf32>
    %230 = arith.negf %229 : vector<2x32xf32>
    %231 = math.exp %230 : vector<2x32xf32>
    %cst_55 = arith.constant 1.000000e+00 : f32
    %232 = vector.broadcast %cst_55 : f32 to vector<2x32xf32>
    %233 = arith.addf %232, %231 : vector<2x32xf32>
    %234 = arith.divf %232, %233 : vector<2x32xf32>
    %235 = arith.mulf %226, %171 : vector<2x32xf32>
    %236 = arith.mulf %220, %228 : vector<2x32xf32>
    %237 = arith.addf %235, %236 : vector<2x32xf32>
    %238 = math.tanh %237 : vector<2x32xf32>
    %239 = arith.mulf %234, %238 : vector<2x32xf32>
    %cst_56 = arith.constant dense<0.000000e+00> : vector<2x64xf32>
    %240 = tpu.matmul %239, %4, %cst_56 {dimension_numbers = #tpu.dot_dimension_numbers<[1], [0], [0], [1], [0, 0, 1, 1], [], []>} : vector<2x32xf32>, vector<32x64xf32>, vector<2x64xf32> -> vector<2x64xf32>
    %241 = vector.extract_strided_slice %209 {offsets = [0, 128], sizes = [2, 64], strides = [1, 1]} : vector<2x192xf32> to vector<2x64xf32>
    %242 = arith.addf %240, %241 : vector<2x64xf32>
    %243 = vector.broadcast %5 : vector<1x64xf32> to vector<2x64xf32>
    %244 = arith.addf %242, %243 : vector<2x64xf32>
    %245 = vector.extract_strided_slice %244 {offsets = [0, 0], sizes = [2, 16], strides = [1, 1]} : vector<2x64xf32> to vector<2x16xf32>
    %246 = arith.negf %245 : vector<2x16xf32>
    %247 = math.exp %246 : vector<2x16xf32>
    %cst_57 = arith.constant 1.000000e+00 : f32
    %248 = vector.broadcast %cst_57 : f32 to vector<2x16xf32>
    %249 = arith.addf %248, %247 : vector<2x16xf32>
    %250 = arith.divf %248, %249 : vector<2x16xf32>
    %251 = vector.extract_strided_slice %244 {offsets = [0, 16], sizes = [2, 16], strides = [1, 1]} : vector<2x64xf32> to vector<2x16xf32>
    %252 = arith.negf %251 : vector<2x16xf32>
    %253 = math.exp %252 : vector<2x16xf32>
    %cst_58 = arith.constant 1.000000e+00 : f32
    %254 = vector.broadcast %cst_58 : f32 to vector<2x16xf32>
    %255 = arith.addf %254, %253 : vector<2x16xf32>
    %256 = arith.divf %254, %255 : vector<2x16xf32>
    %257 = vector.extract_strided_slice %244 {offsets = [0, 32], sizes = [2, 16], strides = [1, 1]} : vector<2x64xf32> to vector<2x16xf32>
    %258 = math.tanh %257 : vector<2x16xf32>
    %259 = vector.extract_strided_slice %244 {offsets = [0, 48], sizes = [2, 16], strides = [1, 1]} : vector<2x64xf32> to vector<2x16xf32>
    %260 = arith.negf %259 : vector<2x16xf32>
    %261 = math.exp %260 : vector<2x16xf32>
    %cst_59 = arith.constant 1.000000e+00 : f32
    %262 = vector.broadcast %cst_59 : f32 to vector<2x16xf32>
    %263 = arith.addf %262, %261 : vector<2x16xf32>
    %264 = arith.divf %262, %263 : vector<2x16xf32>
    %265 = arith.mulf %256, %201 : vector<2x16xf32>
    %266 = arith.mulf %250, %258 : vector<2x16xf32>
    %267 = arith.addf %265, %266 : vector<2x16xf32>
    %268 = math.tanh %267 : vector<2x16xf32>
    %269 = arith.mulf %264, %268 : vector<2x16xf32>
    %270 = arith.index_cast %c3_i32 : i32 to index
    %c0_60 = arith.constant 0 : index
    %c0_61 = arith.constant 0 : index
    %271 = vector.load %arg5[%270, %c0_60, %c0_61] : memref<8x2x16xf32, #tpu.memory_space<vmem>>, vector<1x2x16xf32>
    %272 = vector.shape_cast %271 : vector<1x2x16xf32> to vector<2x16xf32>
    %273 = vector.shape_cast %269 : vector<2x16xf32> to vector<1x2x16xf32>
    tpu.vector_store %arg5[%270, %c0_60, %c0_61], %273 {strides = array<i32>} : memref<8x2x16xf32, #tpu.memory_space<vmem>>, vector<1x2x16xf32>,
    %c4_i32 = arith.constant 4 : i32
    %274 = tpu.concatenate %239, %269 in 1 : vector<2x32xf32>, vector<2x16xf32> -> vector<2x48xf32>
    %cst_62 = arith.constant dense<0.000000e+00> : vector<2x192xf32>
    %275 = tpu.matmul %274, %3, %cst_62 {dimension_numbers = #tpu.dot_dimension_numbers<[1], [0], [0], [1], [0, 0, 1, 1], [], []>} : vector<2x48xf32>, vector<48x192xf32>, vector<2x192xf32> -> vector<2x192xf32>
    %276 = arith.index_cast %c4_i32 : i32 to index
    %c0_63 = arith.constant 0 : index
    %c0_64 = arith.constant 0 : index
    %277 = vector.load %arg1[%276, %c0_63, %c0_64] : memref<8x2x128xf32, #tpu.memory_space<vmem>>, vector<1x2x128xf32>
    %278 = vector.shape_cast %277 : vector<1x2x128xf32> to vector<2x128xf32>
    %279 = vector.extract_strided_slice %275 {offsets = [0, 0], sizes = [2, 128], strides = [1, 1]} : vector<2x192xf32> to vector<2x128xf32>
    %280 = arith.addf %278, %279 : vector<2x128xf32>
    %281 = vector.extract_strided_slice %280 {offsets = [0, 0], sizes = [2, 32], strides = [1, 1]} : vector<2x128xf32> to vector<2x32xf32>
    %282 = arith.negf %281 : vector<2x32xf32>
    %283 = math.exp %282 : vector<2x32xf32>
    %cst_65 = arith.constant 1.000000e+00 : f32
    %284 = vector.broadcast %cst_65 : f32 to vector<2x32xf32>
    %285 = arith.addf %284, %283 : vector<2x32xf32>
    %286 = arith.divf %284, %285 : vector<2x32xf32>
    %287 = vector.extract_strided_slice %280 {offsets = [0, 32], sizes = [2, 32], strides = [1, 1]} : vector<2x128xf32> to vector<2x32xf32>
    %288 = arith.negf %287 : vector<2x32xf32>
    %289 = math.exp %288 : vector<2x32xf32>
    %cst_66 = arith.constant 1.000000e+00 : f32
    %290 = vector.broadcast %cst_66 : f32 to vector<2x32xf32>
    %291 = arith.addf %290, %289 : vector<2x32xf32>
    %292 = arith.divf %290, %291 : vector<2x32xf32>
    %293 = vector.extract_strided_slice %280 {offsets = [0, 64], sizes = [2, 32], strides = [1, 1]} : vector<2x128xf32> to vector<2x32xf32>
    %294 = math.tanh %293 : vector<2x32xf32>
    %295 = vector.extract_strided_slice %280 {offsets = [0, 96], sizes = [2, 32], strides = [1, 1]} : vector<2x128xf32> to vector<2x32xf32>
    %296 = arith.negf %295 : vector<2x32xf32>
    %297 = math.exp %296 : vector<2x32xf32>
    %cst_67 = arith.constant 1.000000e+00 : f32
    %298 = vector.broadcast %cst_67 : f32 to vector<2x32xf32>
    %299 = arith.addf %298, %297 : vector<2x32xf32>
    %300 = arith.divf %298, %299 : vector<2x32xf32>
    %301 = arith.mulf %292, %237 : vector<2x32xf32>
    %302 = arith.mulf %286, %294 : vector<2x32xf32>
    %303 = arith.addf %301, %302 : vector<2x32xf32>
    %304 = math.tanh %303 : vector<2x32xf32>
    %305 = arith.mulf %300, %304 : vector<2x32xf32>
    %cst_68 = arith.constant dense<0.000000e+00> : vector<2x64xf32>
    %306 = tpu.matmul %305, %4, %cst_68 {dimension_numbers = #tpu.dot_dimension_numbers<[1], [0], [0], [1], [0, 0, 1, 1], [], []>} : vector<2x32xf32>, vector<32x64xf32>, vector<2x64xf32> -> vector<2x64xf32>
    %307 = vector.extract_strided_slice %275 {offsets = [0, 128], sizes = [2, 64], strides = [1, 1]} : vector<2x192xf32> to vector<2x64xf32>
    %308 = arith.addf %306, %307 : vector<2x64xf32>
    %309 = vector.broadcast %5 : vector<1x64xf32> to vector<2x64xf32>
    %310 = arith.addf %308, %309 : vector<2x64xf32>
    %311 = vector.extract_strided_slice %310 {offsets = [0, 0], sizes = [2, 16], strides = [1, 1]} : vector<2x64xf32> to vector<2x16xf32>
    %312 = arith.negf %311 : vector<2x16xf32>
    %313 = math.exp %312 : vector<2x16xf32>
    %cst_69 = arith.constant 1.000000e+00 : f32
    %314 = vector.broadcast %cst_69 : f32 to vector<2x16xf32>
    %315 = arith.addf %314, %313 : vector<2x16xf32>
    %316 = arith.divf %314, %315 : vector<2x16xf32>
    %317 = vector.extract_strided_slice %310 {offsets = [0, 16], sizes = [2, 16], strides = [1, 1]} : vector<2x64xf32> to vector<2x16xf32>
    %318 = arith.negf %317 : vector<2x16xf32>
    %319 = math.exp %318 : vector<2x16xf32>
    %cst_70 = arith.constant 1.000000e+00 : f32
    %320 = vector.broadcast %cst_70 : f32 to vector<2x16xf32>
    %321 = arith.addf %320, %319 : vector<2x16xf32>
    %322 = arith.divf %320, %321 : vector<2x16xf32>
    %323 = vector.extract_strided_slice %310 {offsets = [0, 32], sizes = [2, 16], strides = [1, 1]} : vector<2x64xf32> to vector<2x16xf32>
    %324 = math.tanh %323 : vector<2x16xf32>
    %325 = vector.extract_strided_slice %310 {offsets = [0, 48], sizes = [2, 16], strides = [1, 1]} : vector<2x64xf32> to vector<2x16xf32>
    %326 = arith.negf %325 : vector<2x16xf32>
    %327 = math.exp %326 : vector<2x16xf32>
    %cst_71 = arith.constant 1.000000e+00 : f32
    %328 = vector.broadcast %cst_71 : f32 to vector<2x16xf32>
    %329 = arith.addf %328, %327 : vector<2x16xf32>
    %330 = arith.divf %328, %329 : vector<2x16xf32>
    %331 = arith.mulf %322, %267 : vector<2x16xf32>
    %332 = arith.mulf %316, %324 : vector<2x16xf32>
    %333 = arith.addf %331, %332 : vector<2x16xf32>
    %334 = math.tanh %333 : vector<2x16xf32>
    %335 = arith.mulf %330, %334 : vector<2x16xf32>
    %336 = arith.index_cast %c4_i32 : i32 to index
    %c0_72 = arith.constant 0 : index
    %c0_73 = arith.constant 0 : index
    %337 = vector.load %arg5[%336, %c0_72, %c0_73] : memref<8x2x16xf32, #tpu.memory_space<vmem>>, vector<1x2x16xf32>
    %338 = vector.shape_cast %337 : vector<1x2x16xf32> to vector<2x16xf32>
    %339 = vector.shape_cast %335 : vector<2x16xf32> to vector<1x2x16xf32>
    tpu.vector_store %arg5[%336, %c0_72, %c0_73], %339 {strides = array<i32>} : memref<8x2x16xf32, #tpu.memory_space<vmem>>, vector<1x2x16xf32>,
    %c5_i32 = arith.constant 5 : i32
    %340 = tpu.concatenate %305, %335 in 1 : vector<2x32xf32>, vector<2x16xf32> -> vector<2x48xf32>
    %cst_74 = arith.constant dense<0.000000e+00> : vector<2x192xf32>
    %341 = tpu.matmul %340, %3, %cst_74 {dimension_numbers = #tpu.dot_dimension_numbers<[1], [0], [0], [1], [0, 0, 1, 1], [], []>} : vector<2x48xf32>, vector<48x192xf32>, vector<2x192xf32> -> vector<2x192xf32>
    %342 = arith.index_cast %c5_i32 : i32 to index
    %c0_75 = arith.constant 0 : index
    %c0_76 = arith.constant 0 : index
    %343 = vector.load %arg1[%342, %c0_75, %c0_76] : memref<8x2x128xf32, #tpu.memory_space<vmem>>, vector<1x2x128xf32>
    %344 = vector.shape_cast %343 : vector<1x2x128xf32> to vector<2x128xf32>
    %345 = vector.extract_strided_slice %341 {offsets = [0, 0], sizes = [2, 128], strides = [1, 1]} : vector<2x192xf32> to vector<2x128xf32>
    %346 = arith.addf %344, %345 : vector<2x128xf32>
    %347 = vector.extract_strided_slice %346 {offsets = [0, 0], sizes = [2, 32], strides = [1, 1]} : vector<2x128xf32> to vector<2x32xf32>
    %348 = arith.negf %347 : vector<2x32xf32>
    %349 = math.exp %348 : vector<2x32xf32>
    %cst_77 = arith.constant 1.000000e+00 : f32
    %350 = vector.broadcast %cst_77 : f32 to vector<2x32xf32>
    %351 = arith.addf %350, %349 : vector<2x32xf32>
    %352 = arith.divf %350, %351 : vector<2x32xf32>
    %353 = vector.extract_strided_slice %346 {offsets = [0, 32], sizes = [2, 32], strides = [1, 1]} : vector<2x128xf32> to vector<2x32xf32>
    %354 = arith.negf %353 : vector<2x32xf32>
    %355 = math.exp %354 : vector<2x32xf32>
    %cst_78 = arith.constant 1.000000e+00 : f32
    %356 = vector.broadcast %cst_78 : f32 to vector<2x32xf32>
    %357 = arith.addf %356, %355 : vector<2x32xf32>
    %358 = arith.divf %356, %357 : vector<2x32xf32>
    %359 = vector.extract_strided_slice %346 {offsets = [0, 64], sizes = [2, 32], strides = [1, 1]} : vector<2x128xf32> to vector<2x32xf32>
    %360 = math.tanh %359 : vector<2x32xf32>
    %361 = vector.extract_strided_slice %346 {offsets = [0, 96], sizes = [2, 32], strides = [1, 1]} : vector<2x128xf32> to vector<2x32xf32>
    %362 = arith.negf %361 : vector<2x32xf32>
    %363 = math.exp %362 : vector<2x32xf32>
    %cst_79 = arith.constant 1.000000e+00 : f32
    %364 = vector.broadcast %cst_79 : f32 to vector<2x32xf32>
    %365 = arith.addf %364, %363 : vector<2x32xf32>
    %366 = arith.divf %364, %365 : vector<2x32xf32>
    %367 = arith.mulf %358, %303 : vector<2x32xf32>
    %368 = arith.mulf %352, %360 : vector<2x32xf32>
    %369 = arith.addf %367, %368 : vector<2x32xf32>
    %370 = math.tanh %369 : vector<2x32xf32>
    %371 = arith.mulf %366, %370 : vector<2x32xf32>
    %cst_80 = arith.constant dense<0.000000e+00> : vector<2x64xf32>
    %372 = tpu.matmul %371, %4, %cst_80 {dimension_numbers = #tpu.dot_dimension_numbers<[1], [0], [0], [1], [0, 0, 1, 1], [], []>} : vector<2x32xf32>, vector<32x64xf32>, vector<2x64xf32> -> vector<2x64xf32>
    %373 = vector.extract_strided_slice %341 {offsets = [0, 128], sizes = [2, 64], strides = [1, 1]} : vector<2x192xf32> to vector<2x64xf32>
    %374 = arith.addf %372, %373 : vector<2x64xf32>
    %375 = vector.broadcast %5 : vector<1x64xf32> to vector<2x64xf32>
    %376 = arith.addf %374, %375 : vector<2x64xf32>
    %377 = vector.extract_strided_slice %376 {offsets = [0, 0], sizes = [2, 16], strides = [1, 1]} : vector<2x64xf32> to vector<2x16xf32>
    %378 = arith.negf %377 : vector<2x16xf32>
    %379 = math.exp %378 : vector<2x16xf32>
    %cst_81 = arith.constant 1.000000e+00 : f32
    %380 = vector.broadcast %cst_81 : f32 to vector<2x16xf32>
    %381 = arith.addf %380, %379 : vector<2x16xf32>
    %382 = arith.divf %380, %381 : vector<2x16xf32>
    %383 = vector.extract_strided_slice %376 {offsets = [0, 16], sizes = [2, 16], strides = [1, 1]} : vector<2x64xf32> to vector<2x16xf32>
    %384 = arith.negf %383 : vector<2x16xf32>
    %385 = math.exp %384 : vector<2x16xf32>
    %cst_82 = arith.constant 1.000000e+00 : f32
    %386 = vector.broadcast %cst_82 : f32 to vector<2x16xf32>
    %387 = arith.addf %386, %385 : vector<2x16xf32>
    %388 = arith.divf %386, %387 : vector<2x16xf32>
    %389 = vector.extract_strided_slice %376 {offsets = [0, 32], sizes = [2, 16], strides = [1, 1]} : vector<2x64xf32> to vector<2x16xf32>
    %390 = math.tanh %389 : vector<2x16xf32>
    %391 = vector.extract_strided_slice %376 {offsets = [0, 48], sizes = [2, 16], strides = [1, 1]} : vector<2x64xf32> to vector<2x16xf32>
    %392 = arith.negf %391 : vector<2x16xf32>
    %393 = math.exp %392 : vector<2x16xf32>
    %cst_83 = arith.constant 1.000000e+00 : f32
    %394 = vector.broadcast %cst_83 : f32 to vector<2x16xf32>
    %395 = arith.addf %394, %393 : vector<2x16xf32>
    %396 = arith.divf %394, %395 : vector<2x16xf32>
    %397 = arith.mulf %388, %333 : vector<2x16xf32>
    %398 = arith.mulf %382, %390 : vector<2x16xf32>
    %399 = arith.addf %397, %398 : vector<2x16xf32>
    %400 = math.tanh %399 : vector<2x16xf32>
    %401 = arith.mulf %396, %400 : vector<2x16xf32>
    %402 = arith.index_cast %c5_i32 : i32 to index
    %c0_84 = arith.constant 0 : index
    %c0_85 = arith.constant 0 : index
    %403 = vector.load %arg5[%402, %c0_84, %c0_85] : memref<8x2x16xf32, #tpu.memory_space<vmem>>, vector<1x2x16xf32>
    %404 = vector.shape_cast %403 : vector<1x2x16xf32> to vector<2x16xf32>
    %405 = vector.shape_cast %401 : vector<2x16xf32> to vector<1x2x16xf32>
    tpu.vector_store %arg5[%402, %c0_84, %c0_85], %405 {strides = array<i32>} : memref<8x2x16xf32, #tpu.memory_space<vmem>>, vector<1x2x16xf32>,
    %c6_i32 = arith.constant 6 : i32
    %406 = tpu.concatenate %371, %401 in 1 : vector<2x32xf32>, vector<2x16xf32> -> vector<2x48xf32>
    %cst_86 = arith.constant dense<0.000000e+00> : vector<2x192xf32>
    %407 = tpu.matmul %406, %3, %cst_86 {dimension_numbers = #tpu.dot_dimension_numbers<[1], [0], [0], [1], [0, 0, 1, 1], [], []>} : vector<2x48xf32>, vector<48x192xf32>, vector<2x192xf32> -> vector<2x192xf32>
    %408 = arith.index_cast %c6_i32 : i32 to index
    %c0_87 = arith.constant 0 : index
    %c0_88 = arith.constant 0 : index
    %409 = vector.load %arg1[%408, %c0_87, %c0_88] : memref<8x2x128xf32, #tpu.memory_space<vmem>>, vector<1x2x128xf32>
    %410 = vector.shape_cast %409 : vector<1x2x128xf32> to vector<2x128xf32>
    %411 = vector.extract_strided_slice %407 {offsets = [0, 0], sizes = [2, 128], strides = [1, 1]} : vector<2x192xf32> to vector<2x128xf32>
    %412 = arith.addf %410, %411 : vector<2x128xf32>
    %413 = vector.extract_strided_slice %412 {offsets = [0, 0], sizes = [2, 32], strides = [1, 1]} : vector<2x128xf32> to vector<2x32xf32>
    %414 = arith.negf %413 : vector<2x32xf32>
    %415 = math.exp %414 : vector<2x32xf32>
    %cst_89 = arith.constant 1.000000e+00 : f32
    %416 = vector.broadcast %cst_89 : f32 to vector<2x32xf32>
    %417 = arith.addf %416, %415 : vector<2x32xf32>
    %418 = arith.divf %416, %417 : vector<2x32xf32>
    %419 = vector.extract_strided_slice %412 {offsets = [0, 32], sizes = [2, 32], strides = [1, 1]} : vector<2x128xf32> to vector<2x32xf32>
    %420 = arith.negf %419 : vector<2x32xf32>
    %421 = math.exp %420 : vector<2x32xf32>
    %cst_90 = arith.constant 1.000000e+00 : f32
    %422 = vector.broadcast %cst_90 : f32 to vector<2x32xf32>
    %423 = arith.addf %422, %421 : vector<2x32xf32>
    %424 = arith.divf %422, %423 : vector<2x32xf32>
    %425 = vector.extract_strided_slice %412 {offsets = [0, 64], sizes = [2, 32], strides = [1, 1]} : vector<2x128xf32> to vector<2x32xf32>
    %426 = math.tanh %425 : vector<2x32xf32>
    %427 = vector.extract_strided_slice %412 {offsets = [0, 96], sizes = [2, 32], strides = [1, 1]} : vector<2x128xf32> to vector<2x32xf32>
    %428 = arith.negf %427 : vector<2x32xf32>
    %429 = math.exp %428 : vector<2x32xf32>
    %cst_91 = arith.constant 1.000000e+00 : f32
    %430 = vector.broadcast %cst_91 : f32 to vector<2x32xf32>
    %431 = arith.addf %430, %429 : vector<2x32xf32>
    %432 = arith.divf %430, %431 : vector<2x32xf32>
    %433 = arith.mulf %424, %369 : vector<2x32xf32>
    %434 = arith.mulf %418, %426 : vector<2x32xf32>
    %435 = arith.addf %433, %434 : vector<2x32xf32>
    %436 = math.tanh %435 : vector<2x32xf32>
    %437 = arith.mulf %432, %436 : vector<2x32xf32>
    %cst_92 = arith.constant dense<0.000000e+00> : vector<2x64xf32>
    %438 = tpu.matmul %437, %4, %cst_92 {dimension_numbers = #tpu.dot_dimension_numbers<[1], [0], [0], [1], [0, 0, 1, 1], [], []>} : vector<2x32xf32>, vector<32x64xf32>, vector<2x64xf32> -> vector<2x64xf32>
    %439 = vector.extract_strided_slice %407 {offsets = [0, 128], sizes = [2, 64], strides = [1, 1]} : vector<2x192xf32> to vector<2x64xf32>
    %440 = arith.addf %438, %439 : vector<2x64xf32>
    %441 = vector.broadcast %5 : vector<1x64xf32> to vector<2x64xf32>
    %442 = arith.addf %440, %441 : vector<2x64xf32>
    %443 = vector.extract_strided_slice %442 {offsets = [0, 0], sizes = [2, 16], strides = [1, 1]} : vector<2x64xf32> to vector<2x16xf32>
    %444 = arith.negf %443 : vector<2x16xf32>
    %445 = math.exp %444 : vector<2x16xf32>
    %cst_93 = arith.constant 1.000000e+00 : f32
    %446 = vector.broadcast %cst_93 : f32 to vector<2x16xf32>
    %447 = arith.addf %446, %445 : vector<2x16xf32>
    %448 = arith.divf %446, %447 : vector<2x16xf32>
    %449 = vector.extract_strided_slice %442 {offsets = [0, 16], sizes = [2, 16], strides = [1, 1]} : vector<2x64xf32> to vector<2x16xf32>
    %450 = arith.negf %449 : vector<2x16xf32>
    %451 = math.exp %450 : vector<2x16xf32>
    %cst_94 = arith.constant 1.000000e+00 : f32
    %452 = vector.broadcast %cst_94 : f32 to vector<2x16xf32>
    %453 = arith.addf %452, %451 : vector<2x16xf32>
    %454 = arith.divf %452, %453 : vector<2x16xf32>
    %455 = vector.extract_strided_slice %442 {offsets = [0, 32], sizes = [2, 16], strides = [1, 1]} : vector<2x64xf32> to vector<2x16xf32>
    %456 = math.tanh %455 : vector<2x16xf32>
    %457 = vector.extract_strided_slice %442 {offsets = [0, 48], sizes = [2, 16], strides = [1, 1]} : vector<2x64xf32> to vector<2x16xf32>
    %458 = arith.negf %457 : vector<2x16xf32>
    %459 = math.exp %458 : vector<2x16xf32>
    %cst_95 = arith.constant 1.000000e+00 : f32
    %460 = vector.broadcast %cst_95 : f32 to vector<2x16xf32>
    %461 = arith.addf %460, %459 : vector<2x16xf32>
    %462 = arith.divf %460, %461 : vector<2x16xf32>
    %463 = arith.mulf %454, %399 : vector<2x16xf32>
    %464 = arith.mulf %448, %456 : vector<2x16xf32>
    %465 = arith.addf %463, %464 : vector<2x16xf32>
    %466 = math.tanh %465 : vector<2x16xf32>
    %467 = arith.mulf %462, %466 : vector<2x16xf32>
    %468 = arith.index_cast %c6_i32 : i32 to index
    %c0_96 = arith.constant 0 : index
    %c0_97 = arith.constant 0 : index
    %469 = vector.load %arg5[%468, %c0_96, %c0_97] : memref<8x2x16xf32, #tpu.memory_space<vmem>>, vector<1x2x16xf32>
    %470 = vector.shape_cast %469 : vector<1x2x16xf32> to vector<2x16xf32>
    %471 = vector.shape_cast %467 : vector<2x16xf32> to vector<1x2x16xf32>
    tpu.vector_store %arg5[%468, %c0_96, %c0_97], %471 {strides = array<i32>} : memref<8x2x16xf32, #tpu.memory_space<vmem>>, vector<1x2x16xf32>,
    %c7_i32 = arith.constant 7 : i32
    %472 = tpu.concatenate %437, %467 in 1 : vector<2x32xf32>, vector<2x16xf32> -> vector<2x48xf32>
    %cst_98 = arith.constant dense<0.000000e+00> : vector<2x192xf32>
    %473 = tpu.matmul %472, %3, %cst_98 {dimension_numbers = #tpu.dot_dimension_numbers<[1], [0], [0], [1], [0, 0, 1, 1], [], []>} : vector<2x48xf32>, vector<48x192xf32>, vector<2x192xf32> -> vector<2x192xf32>
    %474 = arith.index_cast %c7_i32 : i32 to index
    %c0_99 = arith.constant 0 : index
    %c0_100 = arith.constant 0 : index
    %475 = vector.load %arg1[%474, %c0_99, %c0_100] : memref<8x2x128xf32, #tpu.memory_space<vmem>>, vector<1x2x128xf32>
    %476 = vector.shape_cast %475 : vector<1x2x128xf32> to vector<2x128xf32>
    %477 = vector.extract_strided_slice %473 {offsets = [0, 0], sizes = [2, 128], strides = [1, 1]} : vector<2x192xf32> to vector<2x128xf32>
    %478 = arith.addf %476, %477 : vector<2x128xf32>
    %479 = vector.extract_strided_slice %478 {offsets = [0, 0], sizes = [2, 32], strides = [1, 1]} : vector<2x128xf32> to vector<2x32xf32>
    %480 = arith.negf %479 : vector<2x32xf32>
    %481 = math.exp %480 : vector<2x32xf32>
    %cst_101 = arith.constant 1.000000e+00 : f32
    %482 = vector.broadcast %cst_101 : f32 to vector<2x32xf32>
    %483 = arith.addf %482, %481 : vector<2x32xf32>
    %484 = arith.divf %482, %483 : vector<2x32xf32>
    %485 = vector.extract_strided_slice %478 {offsets = [0, 32], sizes = [2, 32], strides = [1, 1]} : vector<2x128xf32> to vector<2x32xf32>
    %486 = arith.negf %485 : vector<2x32xf32>
    %487 = math.exp %486 : vector<2x32xf32>
    %cst_102 = arith.constant 1.000000e+00 : f32
    %488 = vector.broadcast %cst_102 : f32 to vector<2x32xf32>
    %489 = arith.addf %488, %487 : vector<2x32xf32>
    %490 = arith.divf %488, %489 : vector<2x32xf32>
    %491 = vector.extract_strided_slice %478 {offsets = [0, 64], sizes = [2, 32], strides = [1, 1]} : vector<2x128xf32> to vector<2x32xf32>
    %492 = math.tanh %491 : vector<2x32xf32>
    %493 = vector.extract_strided_slice %478 {offsets = [0, 96], sizes = [2, 32], strides = [1, 1]} : vector<2x128xf32> to vector<2x32xf32>
    %494 = arith.negf %493 : vector<2x32xf32>
    %495 = math.exp %494 : vector<2x32xf32>
    %cst_103 = arith.constant 1.000000e+00 : f32
    %496 = vector.broadcast %cst_103 : f32 to vector<2x32xf32>
    %497 = arith.addf %496, %495 : vector<2x32xf32>
    %498 = arith.divf %496, %497 : vector<2x32xf32>
    %499 = arith.mulf %490, %435 : vector<2x32xf32>
    %500 = arith.mulf %484, %492 : vector<2x32xf32>
    %501 = arith.addf %499, %500 : vector<2x32xf32>
    %502 = math.tanh %501 : vector<2x32xf32>
    %503 = arith.mulf %498, %502 : vector<2x32xf32>
    %cst_104 = arith.constant dense<0.000000e+00> : vector<2x64xf32>
    %504 = tpu.matmul %503, %4, %cst_104 {dimension_numbers = #tpu.dot_dimension_numbers<[1], [0], [0], [1], [0, 0, 1, 1], [], []>} : vector<2x32xf32>, vector<32x64xf32>, vector<2x64xf32> -> vector<2x64xf32>
    %505 = vector.extract_strided_slice %473 {offsets = [0, 128], sizes = [2, 64], strides = [1, 1]} : vector<2x192xf32> to vector<2x64xf32>
    %506 = arith.addf %504, %505 : vector<2x64xf32>
    %507 = vector.broadcast %5 : vector<1x64xf32> to vector<2x64xf32>
    %508 = arith.addf %506, %507 : vector<2x64xf32>
    %509 = vector.extract_strided_slice %508 {offsets = [0, 0], sizes = [2, 16], strides = [1, 1]} : vector<2x64xf32> to vector<2x16xf32>
    %510 = arith.negf %509 : vector<2x16xf32>
    %511 = math.exp %510 : vector<2x16xf32>
    %cst_105 = arith.constant 1.000000e+00 : f32
    %512 = vector.broadcast %cst_105 : f32 to vector<2x16xf32>
    %513 = arith.addf %512, %511 : vector<2x16xf32>
    %514 = arith.divf %512, %513 : vector<2x16xf32>
    %515 = vector.extract_strided_slice %508 {offsets = [0, 16], sizes = [2, 16], strides = [1, 1]} : vector<2x64xf32> to vector<2x16xf32>
    %516 = arith.negf %515 : vector<2x16xf32>
    %517 = math.exp %516 : vector<2x16xf32>
    %cst_106 = arith.constant 1.000000e+00 : f32
    %518 = vector.broadcast %cst_106 : f32 to vector<2x16xf32>
    %519 = arith.addf %518, %517 : vector<2x16xf32>
    %520 = arith.divf %518, %519 : vector<2x16xf32>
    %521 = vector.extract_strided_slice %508 {offsets = [0, 32], sizes = [2, 16], strides = [1, 1]} : vector<2x64xf32> to vector<2x16xf32>
    %522 = math.tanh %521 : vector<2x16xf32>
    %523 = vector.extract_strided_slice %508 {offsets = [0, 48], sizes = [2, 16], strides = [1, 1]} : vector<2x64xf32> to vector<2x16xf32>
    %524 = arith.negf %523 : vector<2x16xf32>
    %525 = math.exp %524 : vector<2x16xf32>
    %cst_107 = arith.constant 1.000000e+00 : f32
    %526 = vector.broadcast %cst_107 : f32 to vector<2x16xf32>
    %527 = arith.addf %526, %525 : vector<2x16xf32>
    %528 = arith.divf %526, %527 : vector<2x16xf32>
    %529 = arith.mulf %520, %465 : vector<2x16xf32>
    %530 = arith.mulf %514, %522 : vector<2x16xf32>
    %531 = arith.addf %529, %530 : vector<2x16xf32>
    %532 = math.tanh %531 : vector<2x16xf32>
    %533 = arith.mulf %528, %532 : vector<2x16xf32>
    %534 = arith.index_cast %c7_i32 : i32 to index
    %c0_108 = arith.constant 0 : index
    %c0_109 = arith.constant 0 : index
    %535 = vector.load %arg5[%534, %c0_108, %c0_109] : memref<8x2x16xf32, #tpu.memory_space<vmem>>, vector<1x2x16xf32>
    %536 = vector.shape_cast %535 : vector<1x2x16xf32> to vector<2x16xf32>
    %537 = vector.shape_cast %533 : vector<2x16xf32> to vector<1x2x16xf32>
    tpu.vector_store %arg5[%534, %c0_108, %c0_109], %537 {strides = array<i32>} : memref<8x2x16xf32, #tpu.memory_space<vmem>>, vector<1x2x16xf32>,
    %c8_i32 = arith.constant 8 : i32
    %c0_110 = arith.constant 0 : index
    %c0_111 = arith.constant 0 : index
    %538 = vector.load %arg6[%c0_110, %c0_111] : memref<2x32xf32, #tpu.memory_space<vmem>>, vector<2x32xf32>
    tpu.vector_store %arg6[%c0_110, %c0_111], %503 {strides = array<i32>} : memref<2x32xf32, #tpu.memory_space<vmem>>, vector<2x32xf32>,
    %c0_112 = arith.constant 0 : index
    %c0_113 = arith.constant 0 : index
    %539 = vector.load %arg7[%c0_112, %c0_113] : memref<2x32xf32, #tpu.memory_space<vmem>>, vector<2x32xf32>
    tpu.vector_store %arg7[%c0_112, %c0_113], %501 {strides = array<i32>} : memref<2x32xf32, #tpu.memory_space<vmem>>, vector<2x32xf32>,
    %c0_114 = arith.constant 0 : index
    %c0_115 = arith.constant 0 : index
    %540 = vector.load %arg8[%c0_114, %c0_115] : memref<2x16xf32, #tpu.memory_space<vmem>>, vector<2x16xf32>
    tpu.vector_store %arg8[%c0_114, %c0_115], %533 {strides = array<i32>} : memref<2x16xf32, #tpu.memory_space<vmem>>, vector<2x16xf32>,
    %c0_116 = arith.constant 0 : index
    %c0_117 = arith.constant 0 : index
    %541 = vector.load %arg9[%c0_116, %c0_117] : memref<2x16xf32, #tpu.memory_space<vmem>>, vector<2x16xf32>
    tpu.vector_store %arg9[%c0_116, %c0_117], %531 {strides = array<i32>} : memref<2x16xf32, #tpu.memory_space<vmem>>, vector<2x16xf32>,
    return
  }
  func.func @transform_0(%arg0: i32) -> (i32, i32, i32) {
    %c0_i32 = arith.constant 0 : i32
    %c0_i32_0 = arith.constant 0 : i32
    %c0_i32_1 = arith.constant 0 : i32
    return %arg0, %c0_i32, %c0_i32_0 : i32, i32, i32
  }
  func.func @transform_1(%arg0: i32) -> (i32, i32) {
    %c0_i32 = arith.constant 0 : i32
    %c0_i32_0 = arith.constant 0 : i32
    %c0_i32_1 = arith.constant 0 : i32
    return %c0_i32, %c0_i32_0 : i32, i32
  }
  func.func @transform_2(%arg0: i32) -> (i32, i32) {
    %c0_i32 = arith.constant 0 : i32
    %c0_i32_0 = arith.constant 0 : i32
    %c0_i32_1 = arith.constant 0 : i32
    return %c0_i32, %c0_i32_0 : i32, i32
  }
  func.func @transform_3(%arg0: i32) -> (i32, i32) {
    %c0_i32 = arith.constant 0 : i32
    %c0_i32_0 = arith.constant 0 : i32
    %c0_i32_1 = arith.constant 0 : i32
    return %c0_i32, %c0_i32_0 : i32, i32
  }
  func.func @transform_4(%arg0: i32) -> (i32, i32, i32) {
    %c0_i32 = arith.constant 0 : i32
    %c0_i32_0 = arith.constant 0 : i32
    %c0_i32_1 = arith.constant 0 : i32
    return %arg0, %c0_i32, %c0_i32_0 : i32, i32, i32
  }
}

</mosaic_0001>

<llo_original>
// kernel: tpu_custom_call.1
$region0: #{tpu_custom_call.1}
  #allocation0 [shape = 'u32[]', space=smem, size = 0x4, offset = 0x4, fixed_abs, tag = 'smem constant byte address 0x4 - core index']
  #allocation1 [shape = 'u32[144,128]{1,0:T(1,128)}', space=vmem, size = 0x12000, scoped, tag = 'internal scratch']
  #allocation2 [shape = 'f32[2,32]{1,0:T(2,128)}', space=vmem, size = 0x400, scoped, tag = 'scratch operand']
  #allocation3 [shape = 'f32[2,32]{1,0:T(2,128)}', space=vmem, size = 0x400, scoped, tag = 'scratch operand']
  #allocation4 [shape = 'f32[2,16]{1,0:T(2,128)}', space=vmem, size = 0x400, scoped, tag = 'scratch operand']
  #allocation5 [shape = 'f32[2,16]{1,0:T(2,128)}', space=vmem, size = 0x400, scoped, tag = 'scratch operand']
  %s0 = inlined_call_operand.hbm [shape: f32[8,2,128], index: 0, kind: input, shape index: {}]
  %s1 = inlined_call_operand.hbm [shape: f32[48,192], index: 1, kind: input, shape index: {}]
  %s2 = inlined_call_operand.hbm [shape: f32[32,64], index: 2, kind: input, shape index: {}]
  %s3 = inlined_call_operand.vmem [shape: f32[1,64], index: 3, kind: input, shape index: {}]
  %s4 = inlined_call_operand.hbm [shape: f32[8,2,16], index: 4, kind: output, shape index: {}]
  %s5 = sld [smem:[#allocation0]]
  $region42: #{tpu_custom_call.1} parent=0
    _
  %s7 = ssub.s32 1, %s5
  %s8 = scalar_select 0, %s7, %s5
  $region1: #{tpu_custom_call.1} parent=0
    #allocation6 [shape = 'u8[8192]{0}', space=vmem, size = 0x2000, scoped, tag = 'input window, operand 0, single buffered']
    #allocation7 [shape = 's32[1]{0}', space=sflag, size = 0x4, scoped, tag = 'scoped memory for tpu_custom_call.1']
    #allocation8 [shape = 's32[1]{0}', space=sflag, size = 0x4, scoped, tag = 'scoped memory for tpu_custom_call.1']
    #allocation9 [shape = 'u8[49152]{0}', space=vmem, size = 0xc000, scoped, tag = 'input window, operand 1, single buffered']
    #allocation10 [shape = 's32[1]{0}', space=sflag, size = 0x4, scoped, tag = 'scoped memory for tpu_custom_call.1']
    #allocation11 [shape = 'u8[16384]{0}', space=vmem, size = 0x4000, scoped, tag = 'input window, operand 2, single buffered']
    #allocation12 [shape = 'u8[8192]{0}', space=vmem, size = 0x2000, scoped, tag = 'output window, operand 0, single buffered']
    %9 = vsyncpa [#allocation7], 0
    %10 = vsyncpa [#allocation10], 0
    %11 = vsyncpa [#allocation8], 0
    // Predicated region
    $region2: #{tpu_custom_call.1} parent=1 // pred_check
      _
    $region3: #{tpu_custom_call.1} parent=1 // pred_check_branch
      %13 = sbr.rel (0) target = $region5
    $region4: #{tpu_custom_call.1} parent=1 // pred_region
      %s15 = ssub.s32 256, 256
      %16 = vsyncadd [#allocation7], %s15
      %s17 = sshll.u32 [#allocation6], 4
      %s18 = int_to_ptr.vmem [resolvable:$true] %s17
      %23 = dma.hbm_to_vmem [thread:$0]  %s0, 256, %s18, [#allocation7], 32, 32, 2
    $region5: #{tpu_custom_call.1} parent=1 // pred_fallthru
      _
    // Predicated region
    $region6: #{tpu_custom_call.1} parent=1 // pred_check
      _
    $region7: #{tpu_custom_call.1} parent=1 // pred_check_branch
      %25 = sbr.rel (0) target = $region9
    $region8: #{tpu_custom_call.1} parent=1 // pred_region
      %s27 = ssub.s32 1536, 1536
      %28 = vsyncadd [#allocation10], %s27
      %s29 = sshll.u32 [#allocation9], 4
      %s30 = int_to_ptr.vmem [resolvable:$true] %s29
      %35 = dma.hbm_to_vmem [thread:$0]  %s1, 1536, %s30, [#allocation10], 256, 256, 16
    $region9: #{tpu_custom_call.1} parent=1 // pred_fallthru
      _
    // Predicated region
    $region10: #{tpu_custom_call.1} parent=1 // pred_check
      _
    $region11: #{tpu_custom_call.1} parent=1 // pred_check_branch
      %37 = sbr.rel (0) target = $region13
    $region12: #{tpu_custom_call.1} parent=1 // pred_region
      %s39 = ssub.s32 512, 512
      %40 = vsyncadd [#allocation10], %s39
      %s41 = sshll.u32 [#allocation11], 4
      %s42 = int_to_ptr.vmem [resolvable:$true] %s41
      %47 = dma.hbm_to_vmem [thread:$0]  %s2, 512, %s42, [#allocation10], 128, 128, 8
    $region13: #{tpu_custom_call.1} parent=1 // pred_fallthru
      _
    // Predicated region
    $region14: #{tpu_custom_call.1} parent=1 // pred_check
      _
    $region15: #{tpu_custom_call.1} parent=1 // pred_check_branch
      %49 = sbr.rel (0) target = $region17
    $region16: #{tpu_custom_call.1} parent=1 // pred_region
      _
    $region17: #{tpu_custom_call.1} parent=1 // pred_fallthru
      _
    // Predicated region
    $region18: #{tpu_custom_call.1} parent=1 // pred_check
      _
    $region19: #{tpu_custom_call.1} parent=1 // pred_check_branch
      %51 = sbr.rel (0) target = $region21
    $region20: #{tpu_custom_call.1} parent=1 // pred_region
      %52 = dma.done [#allocation7], 256
    $region21: #{tpu_custom_call.1} parent=1 // pred_fallthru
      _
    // Predicated region
    $region22: #{tpu_custom_call.1} parent=1 // pred_check
      _
    $region23: #{tpu_custom_call.1} parent=1 // pred_check_branch
      %54 = sbr.rel (0) target = $region25
    $region24: #{tpu_custom_call.1} parent=1 // pred_region
      %55 = dma.done [#allocation10], 1536
    $region25: #{tpu_custom_call.1} parent=1 // pred_fallthru
      _
    // Predicated region
    $region26: #{tpu_custom_call.1} parent=1 // pred_check
      _
    $region27: #{tpu_custom_call.1} parent=1 // pred_check_branch
      %57 = sbr.rel (0) target = $region29
    $region28: #{tpu_custom_call.1} parent=1 // pred_region
      %58 = dma.done [#allocation10], 512
    $region29: #{tpu_custom_call.1} parent=1 // pred_fallthru
      _
    %p59 = scmp.eq.s32.totalorder 0, 0
    // Predicated region
    $region30: #{tpu_custom_call.1} parent=1 // pred_check
      %p60 = pneg %p59
    $region31: #{tpu_custom_call.1} parent=1 // pred_check_branch
      %62 = sbr.rel (%p60) target = $region33
    $region32: #{tpu_custom_call.1} parent=1 // pred_region
      %vm63 = vcmask 254976
      %64 = vst.msk [vmem:[#allocation2] sm:$0x3] %vm63, 0.0
      %65 = vst.msk [vmem:[#allocation3] sm:$0x3] %vm63, 0.0
      %vm66 = vcmask 123904
      %67 = vst.msk [vmem:[#allocation4] sm:$0x3] %vm66, 0.0
      %68 = vst.msk [vmem:[#allocation5] sm:$0x3] %vm66, 0.0
    $region33: #{tpu_custom_call.1} parent=1 // pred_fallthru
      _
    %v69 = vld [vmem:[#allocation9] sm:$0xff]
    %v70 = vld [vmem:[#allocation9 + $0x8] sm:$0xff]
    %v71 = vld [vmem:[#allocation9 + $0x10] sm:$0xff]
    %v72 = vld [vmem:[#allocation9 + $0x18] sm:$0xff]
    %v73 = vld [vmem:[#allocation9 + $0x20] sm:$0xff]
    %v74 = vld [vmem:[#allocation9 + $0x28] sm:$0xff]
    %v75 = vld [vmem:[#allocation9 + $0x30] sm:$0xff]
    %v76 = vld [vmem:[#allocation9 + $0x38] sm:$0xff]
    %v77 = vld [vmem:[#allocation9 + $0x40] sm:$0xff]
    %v78 = vld [vmem:[#allocation9 + $0x48] sm:$0xff]
    %v79 = vld [vmem:[#allocation9 + $0x50] sm:$0xff]
    %v80 = vld [vmem:[#allocation9 + $0x58] sm:$0xff]
    %v81 = vld [vmem:[#allocation11] sm:$0xff]
    %v82 = vld [vmem:[#allocation11 + $0x8] sm:$0xff]
    %v83 = vld [vmem:[#allocation11 + $0x10] sm:$0xff]
    %v84 = vld [vmem:[#allocation11 + $0x18] sm:$0xff]
    %v85 = vld [vmem:[%s3] sm:$0x1]
    %v86 = vld [vmem:[#allocation2] sm:$0x3]
    %v87 = vld [vmem:[#allocation3] sm:$0x3]
    %v88 = vld [vmem:[#allocation4] sm:$0x3]
    %v89 = vld [vmem:[#allocation5] sm:$0x3]
    %91 = vrot.lane.b32.xlu0 %v88, 32
    %v92 = vpop.permute.xlu0 %91
    %vm94 = vcmask 261120
    %v95 = vsel %vm94, %v86, %v92
    %vm96 = vcmask 392192
    %v98 = vsel %vm96, %v95, 0
    %100 = vmatprep.subr.mxu0 0.0
    %101 = vmatpush1.msra.mxu0 0.0
    %102 = vmatprep.subr.mxu0 0.0
    %103 = vmatpush1.msra.mxu0 0.0
    %104 = vmatprep.subr.mxu0 0.0
    %105 = vmatpush1.msra.mxu0 0.0
    %106 = vmatprep.subr.mxu0 0.0
    %107 = vmatpush1.msra.mxu0 0.0
    %108 = vmatprep.subr.mxu0 0.0
    %109 = vmatpush1.msra.mxu0 0.0
    %110 = vmatprep.subr.mxu0 0.0
    %111 = vmatpush1.msra.mxu0 0.0
    %112 = vmatprep.subr.mxu0 0.0
    %113 = vmatpush1.msra.mxu0 0.0
    %114 = vmatprep.subr.mxu0 0.0
    %115 = vmatpush1.msra.mxu0 0.0
    %116 = vmatprep.subr.mxu0 0.0
    %117 = vmatpush1.msra.mxu0 0.0
    %118 = vmatprep.subr.mxu0 0.0
    %119 = vmatpush1.msra.mxu0 0.0
    %120 = vmatprep.subr.mxu0 %v80
    %121 = vmatpush1.msra.mxu0 %v79
    %122 = vmatprep.subr.mxu0 %v78
    %123 = vmatpush1.msra.mxu0 %v77
    %124 = vmatprep.subr.mxu0 %v76
    %125 = vmatpush1.msra.mxu0 %v75
    %126 = vmatprep.subr.mxu0 %v74
    %127 = vmatpush1.msra.mxu0 %v73
    %128 = vmatprep.subr.mxu0 %v72
    %129 = vmatpush1.msra.mxu0 %v71
    %130 = vmatprep.subr.mxu0 %v70
    %131 = vmatpush1.msra.mxu0 %v69
    %132 = vmatprep.subr.mxu0 0.0
    %133 = vmatpush2.msra.mxu0 0.0
    %134 = vmatprep.subr.mxu0 0.0
    %135 = vmatpush2.msra.mxu0 0.0
    %136 = vmatprep.subr.mxu0 0.0
    %137 = vmatpush2.msra.mxu0 0.0
    %138 = vmatprep.subr.mxu0 0.0
    %139 = vmatpush2.msra.mxu0 0.0
    %140 = vmatprep.subr.mxu0 0.0
    %141 = vmatpush2.msra.mxu0 0.0
    %142 = vmatprep.subr.mxu0 0.0
    %143 = vmatpush2.msra.mxu0 0.0
    %144 = vmatprep.subr.mxu0 0.0
    %145 = vmatpush2.msra.mxu0 0.0
    %146 = vmatprep.subr.mxu0 0.0
    %147 = vmatpush2.msra.mxu0 0.0
    %148 = vmatprep.subr.mxu0 0.0
    %149 = vmatpush2.msra.mxu0 0.0
    %150 = vmatprep.subr.mxu0 0.0
    %151 = vmatpush2.msra.mxu0 0.0
    %152 = vmatprep.subr.mxu0 0.0
    %153 = vmatpush2.msra.mxu0 0.0
    %154 = vmatprep.subr.mxu0 0.0
    %155 = vmatpush2.msra.mxu0 0.0
    %156 = vmatprep.subr.mxu0 0.0
    %157 = vmatpush2.msra.mxu0 0.0
    %158 = vmatprep.subr.mxu0 0.0
    %159 = vmatpush2.msra.mxu0 0.0
    %160 = vmatprep.subr.mxu0 0.0
    %161 = vmatpush2.msra.mxu0 0.0
    %162 = vmatprep.subr.mxu0 0.0
    %163 = vmatpush2.msra.mxu0 0.0
    %164 = vmatprep.mubr.f32.mxu0 0.0
    %165 = vmatmul.mubr.f32.gmra.mxu0 %v98
    %v166 = vpop.f32.mrf.mxu0
    %v167 = vadd.f32 0.0, %v166
    %v168 = vpop.f32.mrf.mxu0
    %v169 = vadd.f32 0.0, %v168
    %170 = vdwg.mxu0
    %v171 = vld [vmem:[#allocation6] sm:$0x3]
    %v172 = vadd.f32 %v171, %v167
    %v173 = vxor.u32 %v172, 2147483648
    %v174 = vmul.f32 %v173, 1.442695
    %v175 = vpow.pop %v174
    %v176 = vadd.f32 %v175, 1.0
    %v177 = vrcp.pop %v176
    %v178 = vmul.f32 1.0, %v177
    %v179 = vtanh.pop %v172
    %181 = vrot.lane.b32.xlu0 %v87, 32
    %v182 = vpop.permute.xlu0 %181
    %v184 = vmul.f32 %v178, %v182
    %186 = vrot.lane.b32.xlu0 %v179, 64
    %v187 = vpop.permute.xlu0 %186
    %v189 = vmul.f32 %v178, %v187
    %191 = vrot.lane.b32.xlu0 %v189, 32
    %v192 = vpop.permute.xlu0 %191
    %v194 = vadd.f32 %v184, %v192
    %v195 = vtanh.pop %v194
    %197 = vrot.lane.b32.xlu0 %v195, 64
    %v198 = vpop.permute.xlu0 %197
    %v200 = vmul.f32 %v178, %v198
    %202 = vrot.lane.b32.xlu0 %v200, 32
    %v203 = vpop.permute.xlu0 %202
    %v204 = vsel %vm94, %v203, 0
    %206 = vmatprep.subr.mxu0 0.0
    %207 = vmatpush1.msra.mxu0 0.0
    %208 = vmatprep.subr.mxu0 0.0
    %209 = vmatpush1.msra.mxu0 0.0
    %210 = vmatprep.subr.mxu0 0.0
    %211 = vmatpush1.msra.mxu0 0.0
    %212 = vmatprep.subr.mxu0 0.0
    %213 = vmatpush1.msra.mxu0 0.0
    %214 = vmatprep.subr.mxu0 0.0
    %215 = vmatpush1.msra.mxu0 0.0
    %216 = vmatprep.subr.mxu0 0.0
    %217 = vmatpush1.msra.mxu0 0.0
    %218 = vmatprep.subr.mxu0 0.0
    %219 = vmatpush1.msra.mxu0 0.0
    %220 = vmatprep.subr.mxu0 0.0
    %221 = vmatpush1.msra.mxu0 0.0
    %222 = vmatprep.subr.mxu0 0.0
    %223 = vmatpush1.msra.mxu0 0.0
    %224 = vmatprep.subr.mxu0 0.0
    %225 = vmatpush1.msra.mxu0 0.0
    %226 = vmatprep.subr.mxu0 0.0
    %227 = vmatpush1.msra.mxu0 0.0
    %228 = vmatprep.subr.mxu0 0.0
    %229 = vmatpush1.msra.mxu0 0.0
    %230 = vmatprep.subr.mxu0 0.0
    %231 = vmatpush1.msra.mxu0 %v84
    %232 = vmatprep.subr.mxu0 0.0
    %233 = vmatpush1.msra.mxu0 %v83
    %234 = vmatprep.subr.mxu0 0.0
    %235 = vmatpush1.msra.mxu0 %v82
    %236 = vmatprep.subr.mxu0 0.0
    %237 = vmatpush1.msra.mxu0 %v81
    %238 = vmatprep.subr.mxu0 0.0
    %239 = vmatpush2.msra.mxu0 0.0
    %240 = vmatprep.subr.mxu0 0.0
    %241 = vmatpush2.msra.mxu0 0.0
    %242 = vmatprep.subr.mxu0 0.0
    %243 = vmatpush2.msra.mxu0 0.0
    %244 = vmatprep.subr.mxu0 0.0
    %245 = vmatpush2.msra.mxu0 0.0
    %246 = vmatprep.subr.mxu0 0.0
    %247 = vmatpush2.msra.mxu0 0.0
    %248 = vmatprep.subr.mxu0 0.0
    %249 = vmatpush2.msra.mxu0 0.0
    %250 = vmatprep.subr.mxu0 0.0
    %251 = vmatpush2.msra.mxu0 0.0
    %252 = vmatprep.subr.mxu0 0.0
    %253 = vmatpush2.msra.mxu0 0.0
    %254 = vmatprep.subr.mxu0 0.0
    %255 = vmatpush2.msra.mxu0 0.0
    %256 = vmatprep.subr.mxu0 0.0
    %257 = vmatpush2.msra.mxu0 0.0
    %258 = vmatprep.subr.mxu0 0.0
    %259 = vmatpush2.msra.mxu0 0.0
    %260 = vmatprep.subr.mxu0 0.0
    %261 = vmatpush2.msra.mxu0 0.0
    %262 = vmatprep.subr.mxu0 0.0
    %263 = vmatpush2.msra.mxu0 0.0
    %264 = vmatprep.subr.mxu0 0.0
    %265 = vmatpush2.msra.mxu0 0.0
    %266 = vmatprep.subr.mxu0 0.0
    %267 = vmatpush2.msra.mxu0 0.0
    %268 = vmatprep.subr.mxu0 0.0
    %269 = vmatpush2.msra.mxu0 0.0
    %270 = vmatprep.mubr.f32.mxu0 0.0
    %271 = vmatmul.mubr.f32.gmra.mxu0 %v204
    %v272 = vpop.f32.mrf.mxu0
    %v273 = vadd.f32 %v169, %v272
    %v274 = vpop.f32.mrf.mxu0
    %275 = vdwg.mxu0
    %v277 = vlaneseq
    %v278 = vshrl.u32 %v277, 7
    %v279 = vsub.s32 0, %v278
    %v280 = vrot.slane %v85, %v279
    %v282 = vadd.f32 %v273, %v280
    %v283 = vxor.u32 %v282, 2147483648
    %v284 = vmul.f32 %v283, 1.442695
    %v285 = vpow.pop %v284
    %v286 = vadd.f32 %v285, 1.0
    %v287 = vrcp.pop %v286
    %v288 = vmul.f32 1.0, %v287
    %v289 = vtanh.pop %v282
    %291 = vrot.lane.b32.xlu0 %v89, 16
    %v292 = vpop.permute.xlu0 %291
    %v294 = vmul.f32 %v288, %v292
    %296 = vrot.lane.b32.xlu0 %v289, 96
    %v297 = vpop.permute.xlu0 %296
    %v299 = vmul.f32 %v288, %v297
    %301 = vrot.lane.b32.xlu0 %v299, 16
    %v302 = vpop.permute.xlu0 %301
    %v304 = vadd.f32 %v294, %v302
    %v305 = vtanh.pop %v304
    %307 = vrot.lane.b32.xlu0 %v305, 32
    %v308 = vpop.permute.xlu0 %307
    %v310 = vmul.f32 %v288, %v308
    %312 = vrot.lane.b32.xlu0 %v310, 80
    %v313 = vpop.permute.xlu0 %312
    %vm315 = vcmask 123904
    %316 = vst.msk [vmem:[#allocation12] sm:$0x3] %vm315, %v313
    %318 = vrot.lane.b32.xlu0 %v310, 112
    %v319 = vpop.permute.xlu0 %318
    %v321 = vsel %vm94, %v203, %v319
    %v323 = vsel %vm96, %v321, 0
    %325 = vmatprep.subr.mxu0 0.0
    %326 = vmatpush1.msra.mxu0 0.0
    %327 = vmatprep.subr.mxu0 0.0
    %328 = vmatpush1.msra.mxu0 0.0
    %329 = vmatprep.subr.mxu0 0.0
    %330 = vmatpush1.msra.mxu0 0.0
    %331 = vmatprep.subr.mxu0 0.0
    %332 = vmatpush1.msra.mxu0 0.0
    %333 = vmatprep.subr.mxu0 0.0
    %334 = vmatpush1.msra.mxu0 0.0
    %335 = vmatprep.subr.mxu0 0.0
    %336 = vmatpush1.msra.mxu0 0.0
    %337 = vmatprep.subr.mxu0 0.0
    %338 = vmatpush1.msra.mxu0 0.0
    %339 = vmatprep.subr.mxu0 0.0
    %340 = vmatpush1.msra.mxu0 0.0
    %341 = vmatprep.subr.mxu0 0.0
    %342 = vmatpush1.msra.mxu0 0.0
    %343 = vmatprep.subr.mxu0 0.0
    %344 = vmatpush1.msra.mxu0 0.0
    %345 = vmatprep.subr.mxu0 %v80
    %346 = vmatpush1.msra.mxu0 %v79
    %347 = vmatprep.subr.mxu0 %v78
    %348 = vmatpush1.msra.mxu0 %v77
    %349 = vmatprep.subr.mxu0 %v76
    %350 = vmatpush1.msra.mxu0 %v75
    %351 = vmatprep.subr.mxu0 %v74
    %352 = vmatpush1.msra.mxu0 %v73
    %353 = vmatprep.subr.mxu0 %v72
    %354 = vmatpush1.msra.mxu0 %v71
    %355 = vmatprep.subr.mxu0 %v70
    %356 = vmatpush1.msra.mxu0 %v69
    %357 = vmatprep.subr.mxu0 0.0
    %358 = vmatpush2.msra.mxu0 0.0
    %359 = vmatprep.subr.mxu0 0.0
    %360 = vmatpush2.msra.mxu0 0.0
    %361 = vmatprep.subr.mxu0 0.0
    %362 = vmatpush2.msra.mxu0 0.0
    %363 = vmatprep.subr.mxu0 0.0
    %364 = vmatpush2.msra.mxu0 0.0
    %365 = vmatprep.subr.mxu0 0.0
    %366 = vmatpush2.msra.mxu0 0.0
    %367 = vmatprep.subr.mxu0 0.0
    %368 = vmatpush2.msra.mxu0 0.0
    %369 = vmatprep.subr.mxu0 0.0
    %370 = vmatpush2.msra.mxu0 0.0
    %371 = vmatprep.subr.mxu0 0.0
    %372 = vmatpush2.msra.mxu0 0.0
    %373 = vmatprep.subr.mxu0 0.0
    %374 = vmatpush2.msra.mxu0 0.0
    %375 = vmatprep.subr.mxu0 0.0
    %376 = vmatpush2.msra.mxu0 0.0
    %377 = vmatprep.subr.mxu0 0.0
    %378 = vmatpush2.msra.mxu0 0.0
    %379 = vmatprep.subr.mxu0 0.0
    %380 = vmatpush2.msra.mxu0 0.0
    %381 = vmatprep.subr.mxu0 0.0
    %382 = vmatpush2.msra.mxu0 0.0
    %383 = vmatprep.subr.mxu0 0.0
    %384 = vmatpush2.msra.mxu0 0.0
    %385 = vmatprep.subr.mxu0 0.0
    %386 = vmatpush2.msra.mxu0 0.0
    %387 = vmatprep.subr.mxu0 0.0
    %388 = vmatpush2.msra.mxu0 0.0
    %389 = vmatprep.mubr.f32.mxu0 0.0
    %390 = vmatmul.mubr.f32.gmra.mxu0 %v323
    %v391 = vpop.f32.mrf.mxu0
    %v392 = vadd.f32 0.0, %v391
    %v393 = vpop.f32.mrf.mxu0
    %v394 = vadd.f32 0.0, %v393
    %395 = vdwg.mxu0
    %s396 = scalar_lea.vmem [#allocation6], 2
    %v397 = vld [vmem:[%s396] sm:$0x3]
    %v398 = vadd.f32 %v397, %v392
    %v399 = vxor.u32 %v398, 2147483648
    %v400 = vmul.f32 %v399, 1.442695
    %v401 = vpow.pop %v400
    %v402 = vadd.f32 %v401, 1.0
    %v403 = vrcp.pop %v402
    %v404 = vmul.f32 1.0, %v403
    %v405 = vtanh.pop %v398
    %v406 = vmul.f32 %v404, %v194
    %408 = vrot.lane.b32.xlu0 %v405, 64
    %v409 = vpop.permute.xlu0 %408
    %v411 = vmul.f32 %v404, %v409
    %413 = vrot.lane.b32.xlu0 %v411, 32
    %v414 = vpop.permute.xlu0 %413
    %v416 = vadd.f32 %v406, %v414
    %v417 = vtanh.pop %v416
    %419 = vrot.lane.b32.xlu0 %v417, 64
    %v420 = vpop.permute.xlu0 %419
    %v422 = vmul.f32 %v404, %v420
    %424 = vrot.lane.b32.xlu0 %v422, 32
    %v425 = vpop.permute.xlu0 %424
    %v426 = vsel %vm94, %v425, 0
    %428 = vmatprep.subr.mxu0 0.0
    %429 = vmatpush1.msra.mxu0 0.0
    %430 = vmatprep.subr.mxu0 0.0
    %431 = vmatpush1.msra.mxu0 0.0
    %432 = vmatprep.subr.mxu0 0.0
    %433 = vmatpush1.msra.mxu0 0.0
    %434 = vmatprep.subr.mxu0 0.0
    %435 = vmatpush1.msra.mxu0 0.0
    %436 = vmatprep.subr.mxu0 0.0
    %437 = vmatpush1.msra.mxu0 0.0
    %438 = vmatprep.subr.mxu0 0.0
    %439 = vmatpush1.msra.mxu0 0.0
    %440 = vmatprep.subr.mxu0 0.0
    %441 = vmatpush1.msra.mxu0 0.0
    %442 = vmatprep.subr.mxu0 0.0
    %443 = vmatpush1.msra.mxu0 0.0
    %444 = vmatprep.subr.mxu0 0.0
    %445 = vmatpush1.msra.mxu0 0.0
    %446 = vmatprep.subr.mxu0 0.0
    %447 = vmatpush1.msra.mxu0 0.0
    %448 = vmatprep.subr.mxu0 0.0
    %449 = vmatpush1.msra.mxu0 0.0
    %450 = vmatprep.subr.mxu0 0.0
    %451 = vmatpush1.msra.mxu0 0.0
    %452 = vmatprep.subr.mxu0 0.0
    %453 = vmatpush1.msra.mxu0 %v84
    %454 = vmatprep.subr.mxu0 0.0
    %455 = vmatpush1.msra.mxu0 %v83
    %456 = vmatprep.subr.mxu0 0.0
    %457 = vmatpush1.msra.mxu0 %v82
    %458 = vmatprep.subr.mxu0 0.0
    %459 = vmatpush1.msra.mxu0 %v81
    %460 = vmatprep.subr.mxu0 0.0
    %461 = vmatpush2.msra.mxu0 0.0
    %462 = vmatprep.subr.mxu0 0.0
    %463 = vmatpush2.msra.mxu0 0.0
    %464 = vmatprep.subr.mxu0 0.0
    %465 = vmatpush2.msra.mxu0 0.0
    %466 = vmatprep.subr.mxu0 0.0
    %467 = vmatpush2.msra.mxu0 0.0
    %468 = vmatprep.subr.mxu0 0.0
    %469 = vmatpush2.msra.mxu0 0.0
    %470 = vmatprep.subr.mxu0 0.0
    %471 = vmatpush2.msra.mxu0 0.0
    %472 = vmatprep.subr.mxu0 0.0
    %473 = vmatpush2.msra.mxu0 0.0
    %474 = vmatprep.subr.mxu0 0.0
    %475 = vmatpush2.msra.mxu0 0.0
    %476 = vmatprep.subr.mxu0 0.0
    %477 = vmatpush2.msra.mxu0 0.0
    %478 = vmatprep.subr.mxu0 0.0
    %479 = vmatpush2.msra.mxu0 0.0
    %480 = vmatprep.subr.mxu0 0.0
    %481 = vmatpush2.msra.mxu0 0.0
    %482 = vmatprep.subr.mxu0 0.0
    %483 = vmatpush2.msra.mxu0 0.0
    %484 = vmatprep.subr.mxu0 0.0
    %485 = vmatpush2.msra.mxu0 0.0
    %486 = vmatprep.subr.mxu0 0.0
    %487 = vmatpush2.msra.mxu0 0.0
    %488 = vmatprep.subr.mxu0 0.0
    %489 = vmatpush2.msra.mxu0 0.0
    %490 = vmatprep.subr.mxu0 0.0
    %491 = vmatpush2.msra.mxu0 0.0
    %492 = vmatprep.mubr.f32.mxu0 0.0
    %493 = vmatmul.mubr.f32.gmra.mxu0 %v426
    %v494 = vpop.f32.mrf.mxu0
    %v495 = vadd.f32 %v394, %v494
    %v496 = vpop.f32.mrf.mxu0
    %497 = vdwg.mxu0
    %v498 = vadd.f32 %v495, %v280
    %v499 = vxor.u32 %v498, 2147483648
    %v500 = vmul.f32 %v499, 1.442695
    %v501 = vpow.pop %v500
    %v502 = vadd.f32 %v501, 1.0
    %v503 = vrcp.pop %v502
    %v504 = vmul.f32 1.0, %v503
    %v505 = vtanh.pop %v498
    %v506 = vmul.f32 %v504, %v304
    %508 = vrot.lane.b32.xlu0 %v505, 96
    %v509 = vpop.permute.xlu0 %508
    %v511 = vmul.f32 %v504, %v509
    %513 = vrot.lane.b32.xlu0 %v511, 16
    %v514 = vpop.permute.xlu0 %513
    %v516 = vadd.f32 %v506, %v514
    %v517 = vtanh.pop %v516
    %519 = vrot.lane.b32.xlu0 %v517, 32
    %v520 = vpop.permute.xlu0 %519
    %v522 = vmul.f32 %v504, %v520
    %524 = vrot.lane.b32.xlu0 %v522, 80
    %v525 = vpop.permute.xlu0 %524
    %s527 = scalar_lea.vmem [#allocation12], 2
    %528 = vst.msk [vmem:[%s527] sm:$0x3] %vm315, %v525
    %530 = vrot.lane.b32.xlu0 %v522, 112
    %v531 = vpop.permute.xlu0 %530
    %v533 = vsel %vm94, %v425, %v531
    %v535 = vsel %vm96, %v533, 0
    %537 = vmatprep.subr.mxu0 0.0
    %538 = vmatpush1.msra.mxu0 0.0
    %539 = vmatprep.subr.mxu0 0.0
    %540 = vmatpush1.msra.mxu0 0.0
    %541 = vmatprep.subr.mxu0 0.0
    %542 = vmatpush1.msra.mxu0 0.0
    %543 = vmatprep.subr.mxu0 0.0
    %544 = vmatpush1.msra.mxu0 0.0
    %545 = vmatprep.subr.mxu0 0.0
    %546 = vmatpush1.msra.mxu0 0.0
    %547 = vmatprep.subr.mxu0 0.0
    %548 = vmatpush1.msra.mxu0 0.0
    %549 = vmatprep.subr.mxu0 0.0
    %550 = vmatpush1.msra.mxu0 0.0
    %551 = vmatprep.subr.mxu0 0.0
    %552 = vmatpush1.msra.mxu0 0.0
    %553 = vmatprep.subr.mxu0 0.0
    %554 = vmatpush1.msra.mxu0 0.0
    %555 = vmatprep.subr.mxu0 0.0
    %556 = vmatpush1.msra.mxu0 0.0
    %557 = vmatprep.subr.mxu0 %v80
    %558 = vmatpush1.msra.mxu0 %v79
    %559 = vmatprep.subr.mxu0 %v78
    %560 = vmatpush1.msra.mxu0 %v77
    %561 = vmatprep.subr.mxu0 %v76
    %562 = vmatpush1.msra.mxu0 %v75
    %563 = vmatprep.subr.mxu0 %v74
    %564 = vmatpush1.msra.mxu0 %v73
    %565 = vmatprep.subr.mxu0 %v72
    %566 = vmatpush1.msra.mxu0 %v71
    %567 = vmatprep.subr.mxu0 %v70
    %568 = vmatpush1.msra.mxu0 %v69
    %569 = vmatprep.subr.mxu0 0.0
    %570 = vmatpush2.msra.mxu0 0.0
    %571 = vmatprep.subr.mxu0 0.0
    %572 = vmatpush2.msra.mxu0 0.0
    %573 = vmatprep.subr.mxu0 0.0
    %574 = vmatpush2.msra.mxu0 0.0
    %575 = vmatprep.subr.mxu0 0.0
    %576 = vmatpush2.msra.mxu0 0.0
    %577 = vmatprep.subr.mxu0 0.0
    %578 = vmatpush2.msra.mxu0 0.0
    %579 = vmatprep.subr.mxu0 0.0
    %580 = vmatpush2.msra.mxu0 0.0
    %581 = vmatprep.subr.mxu0 0.0
    %582 = vmatpush2.msra.mxu0 0.0
    %583 = vmatprep.subr.mxu0 0.0
    %584 = vmatpush2.msra.mxu0 0.0
    %585 = vmatprep.subr.mxu0 0.0
    %586 = vmatpush2.msra.mxu0 0.0
    %587 = vmatprep.subr.mxu0 0.0
    %588 = vmatpush2.msra.mxu0 0.0
    %589 = vmatprep.subr.mxu0 0.0
    %590 = vmatpush2.msra.mxu0 0.0
    %591 = vmatprep.subr.mxu0 0.0
    %592 = vmatpush2.msra.mxu0 0.0
    %593 = vmatprep.subr.mxu0 0.0
    %594 = vmatpush2.msra.mxu0 0.0
    %595 = vmatprep.subr.mxu0 0.0
    %596 = vmatpush2.msra.mxu0 0.0
    %597 = vmatprep.subr.mxu0 0.0
    %598 = vmatpush2.msra.mxu0 0.0
    %599 = vmatprep.subr.mxu0 0.0
    %600 = vmatpush2.msra.mxu0 0.0
    %601 = vmatprep.mubr.f32.mxu0 0.0
    %602 = vmatmul.mubr.f32.gmra.mxu0 %v535
    %v603 = vpop.f32.mrf.mxu0
    %v604 = vadd.f32 0.0, %v603
    %v605 = vpop.f32.mrf.mxu0
    %v606 = vadd.f32 0.0, %v605
    %607 = vdwg.mxu0
    %s608 = scalar_lea.vmem [#allocation6], 4
    %v609 = vld [vmem:[%s608] sm:$0x3]
    %v610 = vadd.f32 %v609, %v604
    %v611 = vxor.u32 %v610, 2147483648
    %v612 = vmul.f32 %v611, 1.442695
    %v613 = vpow.pop %v612
    %v614 = vadd.f32 %v613, 1.0
    %v615 = vrcp.pop %v614
    %v616 = vmul.f32 1.0, %v615
    %v617 = vtanh.pop %v610
    %v618 = vmul.f32 %v616, %v416
    %620 = vrot.lane.b32.xlu0 %v617, 64
    %v621 = vpop.permute.xlu0 %620
    %v623 = vmul.f32 %v616, %v621
    %625 = vrot.lane.b32.xlu0 %v623, 32
    %v626 = vpop.permute.xlu0 %625
    %v628 = vadd.f32 %v618, %v626
    %v629 = vtanh.pop %v628
    %631 = vrot.lane.b32.xlu0 %v629, 64
    %v632 = vpop.permute.xlu0 %631
    %v634 = vmul.f32 %v616, %v632
    %636 = vrot.lane.b32.xlu0 %v634, 32
    %v637 = vpop.permute.xlu0 %636
    %v638 = vsel %vm94, %v637, 0
    %640 = vmatprep.subr.mxu0 0.0
    %641 = vmatpush1.msra.mxu0 0.0
    %642 = vmatprep.subr.mxu0 0.0
    %643 = vmatpush1.msra.mxu0 0.0
    %644 = vmatprep.subr.mxu0 0.0
    %645 = vmatpush1.msra.mxu0 0.0
    %646 = vmatprep.subr.mxu0 0.0
    %647 = vmatpush1.msra.mxu0 0.0
    %648 = vmatprep.subr.mxu0 0.0
    %649 = vmatpush1.msra.mxu0 0.0
    %650 = vmatprep.subr.mxu0 0.0
    %651 = vmatpush1.msra.mxu0 0.0
    %652 = vmatprep.subr.mxu0 0.0
    %653 = vmatpush1.msra.mxu0 0.0
    %654 = vmatprep.subr.mxu0 0.0
    %655 = vmatpush1.msra.mxu0 0.0
    %656 = vmatprep.subr.mxu0 0.0
    %657 = vmatpush1.msra.mxu0 0.0
    %658 = vmatprep.subr.mxu0 0.0
    %659 = vmatpush1.msra.mxu0 0.0
    %660 = vmatprep.subr.mxu0 0.0
    %661 = vmatpush1.msra.mxu0 0.0
    %662 = vmatprep.subr.mxu0 0.0
    %663 = vmatpush1.msra.mxu0 0.0
    %664 = vmatprep.subr.mxu0 0.0
    %665 = vmatpush1.msra.mxu0 %v84
    %666 = vmatprep.subr.mxu0 0.0
    %667 = vmatpush1.msra.mxu0 %v83
    %668 = vmatprep.subr.mxu0 0.0
    %669 = vmatpush1.msra.mxu0 %v82
    %670 = vmatprep.subr.mxu0 0.0
    %671 = vmatpush1.msra.mxu0 %v81
    %672 = vmatprep.subr.mxu0 0.0
    %673 = vmatpush2.msra.mxu0 0.0
    %674 = vmatprep.subr.mxu0 0.0
    %675 = vmatpush2.msra.mxu0 0.0
    %676 = vmatprep.subr.mxu0 0.0
    %677 = vmatpush2.msra.mxu0 0.0
    %678 = vmatprep.subr.mxu0 0.0
    %679 = vmatpush2.msra.mxu0 0.0
    %680 = vmatprep.subr.mxu0 0.0
    %681 = vmatpush2.msra.mxu0 0.0
    %682 = vmatprep.subr.mxu0 0.0
    %683 = vmatpush2.msra.mxu0 0.0
    %684 = vmatprep.subr.mxu0 0.0
    %685 = vmatpush2.msra.mxu0 0.0
    %686 = vmatprep.subr.mxu0 0.0
    %687 = vmatpush2.msra.mxu0 0.0
    %688 = vmatprep.subr.mxu0 0.0
    %689 = vmatpush2.msra.mxu0 0.0
    %690 = vmatprep.subr.mxu0 0.0
    %691 = vmatpush2.msra.mxu0 0.0
    %692 = vmatprep.subr.mxu0 0.0
    %693 = vmatpush2.msra.mxu0 0.0
    %694 = vmatprep.subr.mxu0 0.0
    %695 = vmatpush2.msra.mxu0 0.0
    %696 = vmatprep.subr.mxu0 0.0
    %697 = vmatpush2.msra.mxu0 0.0
    %698 = vmatprep.subr.mxu0 0.0
    %699 = vmatpush2.msra.mxu0 0.0
    %700 = vmatprep.subr.mxu0 0.0
    %701 = vmatpush2.msra.mxu0 0.0
    %702 = vmatprep.subr.mxu0 0.0
    %703 = vmatpush2.msra.mxu0 0.0
    %704 = vmatprep.mubr.f32.mxu0 0.0
    %705 = vmatmul.mubr.f32.gmra.mxu0 %v638
    %v706 = vpop.f32.mrf.mxu0
    %v707 = vadd.f32 %v606, %v706
    %v708 = vpop.f32.mrf.mxu0
    %709 = vdwg.mxu0
    %v710 = vadd.f32 %v707, %v280
    %v711 = vxor.u32 %v710, 2147483648
    %v712 = vmul.f32 %v711, 1.442695
    %v713 = vpow.pop %v712
    %v714 = vadd.f32 %v713, 1.0
    %v715 = vrcp.pop %v714
    %v716 = vmul.f32 1.0, %v715
    %v717 = vtanh.pop %v710
    %v718 = vmul.f32 %v716, %v516
    %720 = vrot.lane.b32.xlu0 %v717, 96
    %v721 = vpop.permute.xlu0 %720
    %v723 = vmul.f32 %v716, %v721
    %725 = vrot.lane.b32.xlu0 %v723, 16
    %v726 = vpop.permute.xlu0 %725
    %v728 = vadd.f32 %v718, %v726
    %v729 = vtanh.pop %v728
    %731 = vrot.lane.b32.xlu0 %v729, 32
    %v732 = vpop.permute.xlu0 %731
    %v734 = vmul.f32 %v716, %v732
    %736 = vrot.lane.b32.xlu0 %v734, 80
    %v737 = vpop.permute.xlu0 %736
    %s739 = scalar_lea.vmem [#allocation12], 4
    %740 = vst.msk [vmem:[%s739] sm:$0x3] %vm315, %v737
    %742 = vrot.lane.b32.xlu0 %v734, 112
    %v743 = vpop.permute.xlu0 %742
    %v745 = vsel %vm94, %v637, %v743
    %v747 = vsel %vm96, %v745, 0
    %749 = vmatprep.subr.mxu0 0.0
    %750 = vmatpush1.msra.mxu0 0.0
    %751 = vmatprep.subr.mxu0 0.0
    %752 = vmatpush1.msra.mxu0 0.0
    %753 = vmatprep.subr.mxu0 0.0
    %754 = vmatpush1.msra.mxu0 0.0
    %755 = vmatprep.subr.mxu0 0.0
    %756 = vmatpush1.msra.mxu0 0.0
    %757 = vmatprep.subr.mxu0 0.0
    %758 = vmatpush1.msra.mxu0 0.0
    %759 = vmatprep.subr.mxu0 0.0
    %760 = vmatpush1.msra.mxu0 0.0
    %761 = vmatprep.subr.mxu0 0.0
    %762 = vmatpush1.msra.mxu0 0.0
    %763 = vmatprep.subr.mxu0 0.0
    %764 = vmatpush1.msra.mxu0 0.0
    %765 = vmatprep.subr.mxu0 0.0
    %766 = vmatpush1.msra.mxu0 0.0
    %767 = vmatprep.subr.mxu0 0.0
    %768 = vmatpush1.msra.mxu0 0.0
    %769 = vmatprep.subr.mxu0 %v80
    %770 = vmatpush1.msra.mxu0 %v79
    %771 = vmatprep.subr.mxu0 %v78
    %772 = vmatpush1.msra.mxu0 %v77
    %773 = vmatprep.subr.mxu0 %v76
    %774 = vmatpush1.msra.mxu0 %v75
    %775 = vmatprep.subr.mxu0 %v74
    %776 = vmatpush1.msra.mxu0 %v73
    %777 = vmatprep.subr.mxu0 %v72
    %778 = vmatpush1.msra.mxu0 %v71
    %779 = vmatprep.subr.mxu0 %v70
    %780 = vmatpush1.msra.mxu0 %v69
    %781 = vmatprep.subr.mxu0 0.0
    %782 = vmatpush2.msra.mxu0 0.0
    %783 = vmatprep.subr.mxu0 0.0
    %784 = vmatpush2.msra.mxu0 0.0
    %785 = vmatprep.subr.mxu0 0.0
    %786 = vmatpush2.msra.mxu0 0.0
    %787 = vmatprep.subr.mxu0 0.0
    %788 = vmatpush2.msra.mxu0 0.0
    %789 = vmatprep.subr.mxu0 0.0
    %790 = vmatpush2.msra.mxu0 0.0
    %791 = vmatprep.subr.mxu0 0.0
    %792 = vmatpush2.msra.mxu0 0.0
    %793 = vmatprep.subr.mxu0 0.0
    %794 = vmatpush2.msra.mxu0 0.0
    %795 = vmatprep.subr.mxu0 0.0
    %796 = vmatpush2.msra.mxu0 0.0
    %797 = vmatprep.subr.mxu0 0.0
    %798 = vmatpush2.msra.mxu0 0.0
    %799 = vmatprep.subr.mxu0 0.0
    %800 = vmatpush2.msra.mxu0 0.0
    %801 = vmatprep.subr.mxu0 0.0
    %802 = vmatpush2.msra.mxu0 0.0
    %803 = vmatprep.subr.mxu0 0.0
    %804 = vmatpush2.msra.mxu0 0.0
    %805 = vmatprep.subr.mxu0 0.0
    %806 = vmatpush2.msra.mxu0 0.0
    %807 = vmatprep.subr.mxu0 0.0
    %808 = vmatpush2.msra.mxu0 0.0
    %809 = vmatprep.subr.mxu0 0.0
    %810 = vmatpush2.msra.mxu0 0.0
    %811 = vmatprep.subr.mxu0 0.0
    %812 = vmatpush2.msra.mxu0 0.0
    %813 = vmatprep.mubr.f32.mxu0 0.0
    %814 = vmatmul.mubr.f32.gmra.mxu0 %v747
    %v815 = vpop.f32.mrf.mxu0
    %v816 = vadd.f32 0.0, %v815
    %v817 = vpop.f32.mrf.mxu0
    %v818 = vadd.f32 0.0, %v817
    %819 = vdwg.mxu0
    %s820 = scalar_lea.vmem [#allocation6], 6
    %v821 = vld [vmem:[%s820] sm:$0x3]
    %v822 = vadd.f32 %v821, %v816
    %v823 = vxor.u32 %v822, 2147483648
    %v824 = vmul.f32 %v823, 1.442695
    %v825 = vpow.pop %v824
    %v826 = vadd.f32 %v825, 1.0
    %v827 = vrcp.pop %v826
    %v828 = vmul.f32 1.0, %v827
    %v829 = vtanh.pop %v822
    %v830 = vmul.f32 %v828, %v628
    %832 = vrot.lane.b32.xlu0 %v829, 64
    %v833 = vpop.permute.xlu0 %832
    %v835 = vmul.f32 %v828, %v833
    %837 = vrot.lane.b32.xlu0 %v835, 32
    %v838 = vpop.permute.xlu0 %837
    %v840 = vadd.f32 %v830, %v838
    %v841 = vtanh.pop %v840
    %843 = vrot.lane.b32.xlu0 %v841, 64
    %v844 = vpop.permute.xlu0 %843
    %v846 = vmul.f32 %v828, %v844
    %848 = vrot.lane.b32.xlu0 %v846, 32
    %v849 = vpop.permute.xlu0 %848
    %v850 = vsel %vm94, %v849, 0
    %852 = vmatprep.subr.mxu0 0.0
    %853 = vmatpush1.msra.mxu0 0.0
    %854 = vmatprep.subr.mxu0 0.0
    %855 = vmatpush1.msra.mxu0 0.0
    %856 = vmatprep.subr.mxu0 0.0
    %857 = vmatpush1.msra.mxu0 0.0
    %858 = vmatprep.subr.mxu0 0.0
    %859 = vmatpush1.msra.mxu0 0.0
    %860 = vmatprep.subr.mxu0 0.0
    %861 = vmatpush1.msra.mxu0 0.0
    %862 = vmatprep.subr.mxu0 0.0
    %863 = vmatpush1.msra.mxu0 0.0
    %864 = vmatprep.subr.mxu0 0.0
    %865 = vmatpush1.msra.mxu0 0.0
    %866 = vmatprep.subr.mxu0 0.0
    %867 = vmatpush1.msra.mxu0 0.0
    %868 = vmatprep.subr.mxu0 0.0
    %869 = vmatpush1.msra.mxu0 0.0
    %870 = vmatprep.subr.mxu0 0.0
    %871 = vmatpush1.msra.mxu0 0.0
    %872 = vmatprep.subr.mxu0 0.0
    %873 = vmatpush1.msra.mxu0 0.0
    %874 = vmatprep.subr.mxu0 0.0
    %875 = vmatpush1.msra.mxu0 0.0
    %876 = vmatprep.subr.mxu0 0.0
    %877 = vmatpush1.msra.mxu0 %v84
    %878 = vmatprep.subr.mxu0 0.0
    %879 = vmatpush1.msra.mxu0 %v83
    %880 = vmatprep.subr.mxu0 0.0
    %881 = vmatpush1.msra.mxu0 %v82
    %882 = vmatprep.subr.mxu0 0.0
    %883 = vmatpush1.msra.mxu0 %v81
    %884 = vmatprep.subr.mxu0 0.0
    %885 = vmatpush2.msra.mxu0 0.0
    %886 = vmatprep.subr.mxu0 0.0
    %887 = vmatpush2.msra.mxu0 0.0
    %888 = vmatprep.subr.mxu0 0.0
    %889 = vmatpush2.msra.mxu0 0.0
    %890 = vmatprep.subr.mxu0 0.0
    %891 = vmatpush2.msra.mxu0 0.0
    %892 = vmatprep.subr.mxu0 0.0
    %893 = vmatpush2.msra.mxu0 0.0
    %894 = vmatprep.subr.mxu0 0.0
    %895 = vmatpush2.msra.mxu0 0.0
    %896 = vmatprep.subr.mxu0 0.0
    %897 = vmatpush2.msra.mxu0 0.0
    %898 = vmatprep.subr.mxu0 0.0
    %899 = vmatpush2.msra.mxu0 0.0
    %900 = vmatprep.subr.mxu0 0.0
    %901 = vmatpush2.msra.mxu0 0.0
    %902 = vmatprep.subr.mxu0 0.0
    %903 = vmatpush2.msra.mxu0 0.0
    %904 = vmatprep.subr.mxu0 0.0
    %905 = vmatpush2.msra.mxu0 0.0
    %906 = vmatprep.subr.mxu0 0.0
    %907 = vmatpush2.msra.mxu0 0.0
    %908 = vmatprep.subr.mxu0 0.0
    %909 = vmatpush2.msra.mxu0 0.0
    %910 = vmatprep.subr.mxu0 0.0
    %911 = vmatpush2.msra.mxu0 0.0
    %912 = vmatprep.subr.mxu0 0.0
    %913 = vmatpush2.msra.mxu0 0.0
    %914 = vmatprep.subr.mxu0 0.0
    %915 = vmatpush2.msra.mxu0 0.0
    %916 = vmatprep.mubr.f32.mxu0 0.0
    %917 = vmatmul.mubr.f32.gmra.mxu0 %v850
    %v918 = vpop.f32.mrf.mxu0
    %v919 = vadd.f32 %v818, %v918
    %v920 = vpop.f32.mrf.mxu0
    %921 = vdwg.mxu0
    %v922 = vadd.f32 %v919, %v280
    %v923 = vxor.u32 %v922, 2147483648
    %v924 = vmul.f32 %v923, 1.442695
    %v925 = vpow.pop %v924
    %v926 = vadd.f32 %v925, 1.0
    %v927 = vrcp.pop %v926
    %v928 = vmul.f32 1.0, %v927
    %v929 = vtanh.pop %v922
    %v930 = vmul.f32 %v928, %v728
    %932 = vrot.lane.b32.xlu0 %v929, 96
    %v933 = vpop.permute.xlu0 %932
    %v935 = vmul.f32 %v928, %v933
    %937 = vrot.lane.b32.xlu0 %v935, 16
    %v938 = vpop.permute.xlu0 %937
    %v940 = vadd.f32 %v930, %v938
    %v941 = vtanh.pop %v940
    %943 = vrot.lane.b32.xlu0 %v941, 32
    %v944 = vpop.permute.xlu0 %943
    %v946 = vmul.f32 %v928, %v944
    %948 = vrot.lane.b32.xlu0 %v946, 80
    %v949 = vpop.permute.xlu0 %948
    %s951 = scalar_lea.vmem [#allocation12], 6
    %952 = vst.msk [vmem:[%s951] sm:$0x3] %vm315, %v949
    %954 = vrot.lane.b32.xlu0 %v946, 112
    %v955 = vpop.permute.xlu0 %954
    %v957 = vsel %vm94, %v849, %v955
    %v959 = vsel %vm96, %v957, 0
    %961 = vmatprep.subr.mxu0 0.0
    %962 = vmatpush1.msra.mxu0 0.0
    %963 = vmatprep.subr.mxu0 0.0
    %964 = vmatpush1.msra.mxu0 0.0
    %965 = vmatprep.subr.mxu0 0.0
    %966 = vmatpush1.msra.mxu0 0.0
    %967 = vmatprep.subr.mxu0 0.0
    %968 = vmatpush1.msra.mxu0 0.0
    %969 = vmatprep.subr.mxu0 0.0
    %970 = vmatpush1.msra.mxu0 0.0
    %971 = vmatprep.subr.mxu0 0.0
    %972 = vmatpush1.msra.mxu0 0.0
    %973 = vmatprep.subr.mxu0 0.0
    %974 = vmatpush1.msra.mxu0 0.0
    %975 = vmatprep.subr.mxu0 0.0
    %976 = vmatpush1.msra.mxu0 0.0
    %977 = vmatprep.subr.mxu0 0.0
    %978 = vmatpush1.msra.mxu0 0.0
    %979 = vmatprep.subr.mxu0 0.0
    %980 = vmatpush1.msra.mxu0 0.0
    %981 = vmatprep.subr.mxu0 %v80
    %982 = vmatpush1.msra.mxu0 %v79
    %983 = vmatprep.subr.mxu0 %v78
    %984 = vmatpush1.msra.mxu0 %v77
    %985 = vmatprep.subr.mxu0 %v76
    %986 = vmatpush1.msra.mxu0 %v75
    %987 = vmatprep.subr.mxu0 %v74
    %988 = vmatpush1.msra.mxu0 %v73
    %989 = vmatprep.subr.mxu0 %v72
    %990 = vmatpush1.msra.mxu0 %v71
    %991 = vmatprep.subr.mxu0 %v70
    %992 = vmatpush1.msra.mxu0 %v69
    %993 = vmatprep.subr.mxu0 0.0
    %994 = vmatpush2.msra.mxu0 0.0
    %995 = vmatprep.subr.mxu0 0.0
    %996 = vmatpush2.msra.mxu0 0.0
    %997 = vmatprep.subr.mxu0 0.0
    %998 = vmatpush2.msra.mxu0 0.0
    %999 = vmatprep.subr.mxu0 0.0
    %1000 = vmatpush2.msra.mxu0 0.0
    %1001 = vmatprep.subr.mxu0 0.0
    %1002 = vmatpush2.msra.mxu0 0.0
    %1003 = vmatprep.subr.mxu0 0.0
    %1004 = vmatpush2.msra.mxu0 0.0
    %1005 = vmatprep.subr.mxu0 0.0
    %1006 = vmatpush2.msra.mxu0 0.0
    %1007 = vmatprep.subr.mxu0 0.0
    %1008 = vmatpush2.msra.mxu0 0.0
    %1009 = vmatprep.subr.mxu0 0.0
    %1010 = vmatpush2.msra.mxu0 0.0
    %1011 = vmatprep.subr.mxu0 0.0
    %1012 = vmatpush2.msra.mxu0 0.0
    %1013 = vmatprep.subr.mxu0 0.0
    %1014 = vmatpush2.msra.mxu0 0.0
    %1015 = vmatprep.subr.mxu0 0.0
    %1016 = vmatpush2.msra.mxu0 0.0
    %1017 = vmatprep.subr.mxu0 0.0
    %1018 = vmatpush2.msra.mxu0 0.0
    %1019 = vmatprep.subr.mxu0 0.0
    %1020 = vmatpush2.msra.mxu0 0.0
    %1021 = vmatprep.subr.mxu0 0.0
    %1022 = vmatpush2.msra.mxu0 0.0
    %1023 = vmatprep.subr.mxu0 0.0
    %1024 = vmatpush2.msra.mxu0 0.0
    %1025 = vmatprep.mubr.f32.mxu0 0.0
    %1026 = vmatmul.mubr.f32.gmra.mxu0 %v959
    %v1027 = vpop.f32.mrf.mxu0
    %v1028 = vadd.f32 0.0, %v1027
    %v1029 = vpop.f32.mrf.mxu0
    %v1030 = vadd.f32 0.0, %v1029
    %1031 = vdwg.mxu0
    %s1032 = scalar_lea.vmem [#allocation6], 8
    %v1033 = vld [vmem:[%s1032] sm:$0x3]
    %v1034 = vadd.f32 %v1033, %v1028
    %v1035 = vxor.u32 %v1034, 2147483648
    %v1036 = vmul.f32 %v1035, 1.442695
    %v1037 = vpow.pop %v1036
    %v1038 = vadd.f32 %v1037, 1.0
    %v1039 = vrcp.pop %v1038
    %v1040 = vmul.f32 1.0, %v1039
    %v1041 = vtanh.pop %v1034
    %v1042 = vmul.f32 %v1040, %v840
    %1044 = vrot.lane.b32.xlu0 %v1041, 64
    %v1045 = vpop.permute.xlu0 %1044
    %v1047 = vmul.f32 %v1040, %v1045
    %1049 = vrot.lane.b32.xlu0 %v1047, 32
    %v1050 = vpop.permute.xlu0 %1049
    %v1052 = vadd.f32 %v1042, %v1050
    %v1053 = vtanh.pop %v1052
    %1055 = vrot.lane.b32.xlu0 %v1053, 64
    %v1056 = vpop.permute.xlu0 %1055
    %v1058 = vmul.f32 %v1040, %v1056
    %1060 = vrot.lane.b32.xlu0 %v1058, 32
    %v1061 = vpop.permute.xlu0 %1060
    %v1062 = vsel %vm94, %v1061, 0
    %1064 = vmatprep.subr.mxu0 0.0
    %1065 = vmatpush1.msra.mxu0 0.0
    %1066 = vmatprep.subr.mxu0 0.0
    %1067 = vmatpush1.msra.mxu0 0.0
    %1068 = vmatprep.subr.mxu0 0.0
    %1069 = vmatpush1.msra.mxu0 0.0
    %1070 = vmatprep.subr.mxu0 0.0
    %1071 = vmatpush1.msra.mxu0 0.0
    %1072 = vmatprep.subr.mxu0 0.0
    %1073 = vmatpush1.msra.mxu0 0.0
    %1074 = vmatprep.subr.mxu0 0.0
    %1075 = vmatpush1.msra.mxu0 0.0
    %1076 = vmatprep.subr.mxu0 0.0
    %1077 = vmatpush1.msra.mxu0 0.0
    %1078 = vmatprep.subr.mxu0 0.0
    %1079 = vmatpush1.msra.mxu0 0.0
    %1080 = vmatprep.subr.mxu0 0.0
    %1081 = vmatpush1.msra.mxu0 0.0
    %1082 = vmatprep.subr.mxu0 0.0
    %1083 = vmatpush1.msra.mxu0 0.0
    %1084 = vmatprep.subr.mxu0 0.0
    %1085 = vmatpush1.msra.mxu0 0.0
    %1086 = vmatprep.subr.mxu0 0.0
    %1087 = vmatpush1.msra.mxu0 0.0
    %1088 = vmatprep.subr.mxu0 0.0
    %1089 = vmatpush1.msra.mxu0 %v84
    %1090 = vmatprep.subr.mxu0 0.0
    %1091 = vmatpush1.msra.mxu0 %v83
    %1092 = vmatprep.subr.mxu0 0.0
    %1093 = vmatpush1.msra.mxu0 %v82
    %1094 = vmatprep.subr.mxu0 0.0
    %1095 = vmatpush1.msra.mxu0 %v81
    %1096 = vmatprep.subr.mxu0 0.0
    %1097 = vmatpush2.msra.mxu0 0.0
    %1098 = vmatprep.subr.mxu0 0.0
    %1099 = vmatpush2.msra.mxu0 0.0
    %1100 = vmatprep.subr.mxu0 0.0
    %1101 = vmatpush2.msra.mxu0 0.0
    %1102 = vmatprep.subr.mxu0 0.0
    %1103 = vmatpush2.msra.mxu0 0.0
    %1104 = vmatprep.subr.mxu0 0.0
    %1105 = vmatpush2.msra.mxu0 0.0
    %1106 = vmatprep.subr.mxu0 0.0
    %1107 = vmatpush2.msra.mxu0 0.0
    %1108 = vmatprep.subr.mxu0 0.0
    %1109 = vmatpush2.msra.mxu0 0.0
    %1110 = vmatprep.subr.mxu0 0.0
    %1111 = vmatpush2.msra.mxu0 0.0
    %1112 = vmatprep.subr.mxu0 0.0
    %1113 = vmatpush2.msra.mxu0 0.0
    %1114 = vmatprep.subr.mxu0 0.0
    %1115 = vmatpush2.msra.mxu0 0.0
    %1116 = vmatprep.subr.mxu0 0.0
    %1117 = vmatpush2.msra.mxu0 0.0
    %1118 = vmatprep.subr.mxu0 0.0
    %1119 = vmatpush2.msra.mxu0 0.0
    %1120 = vmatprep.subr.mxu0 0.0
    %1121 = vmatpush2.msra.mxu0 0.0
    %1122 = vmatprep.subr.mxu0 0.0
    %1123 = vmatpush2.msra.mxu0 0.0
    %1124 = vmatprep.subr.mxu0 0.0
    %1125 = vmatpush2.msra.mxu0 0.0
    %1126 = vmatprep.subr.mxu0 0.0
    %1127 = vmatpush2.msra.mxu0 0.0
    %1128 = vmatprep.mubr.f32.mxu0 0.0
    %1129 = vmatmul.mubr.f32.gmra.mxu0 %v1062
    %v1130 = vpop.f32.mrf.mxu0
    %v1131 = vadd.f32 %v1030, %v1130
    %v1132 = vpop.f32.mrf.mxu0
    %1133 = vdwg.mxu0
    %v1134 = vadd.f32 %v1131, %v280
    %v1135 = vxor.u32 %v1134, 2147483648
    %v1136 = vmul.f32 %v1135, 1.442695
    %v1137 = vpow.pop %v1136
    %v1138 = vadd.f32 %v1137, 1.0
    %v1139 = vrcp.pop %v1138
    %v1140 = vmul.f32 1.0, %v1139
    %v1141 = vtanh.pop %v1134
    %v1142 = vmul.f32 %v1140, %v940
    %1144 = vrot.lane.b32.xlu0 %v1141, 96
    %v1145 = vpop.permute.xlu0 %1144
    %v1147 = vmul.f32 %v1140, %v1145
    %1149 = vrot.lane.b32.xlu0 %v1147, 16
    %v1150 = vpop.permute.xlu0 %1149
    %v1152 = vadd.f32 %v1142, %v1150
    %v1153 = vtanh.pop %v1152
    %1155 = vrot.lane.b32.xlu0 %v1153, 32
    %v1156 = vpop.permute.xlu0 %1155
    %v1158 = vmul.f32 %v1140, %v1156
    %1160 = vrot.lane.b32.xlu0 %v1158, 80
    %v1161 = vpop.permute.xlu0 %1160
    %s1163 = scalar_lea.vmem [#allocation12], 8
    %1164 = vst.msk [vmem:[%s1163] sm:$0x3] %vm315, %v1161
    %1166 = vrot.lane.b32.xlu0 %v1158, 112
    %v1167 = vpop.permute.xlu0 %1166
    %v1169 = vsel %vm94, %v1061, %v1167
    %v1171 = vsel %vm96, %v1169, 0
    %1173 = vmatprep.subr.mxu0 0.0
    %1174 = vmatpush1.msra.mxu0 0.0
    %1175 = vmatprep.subr.mxu0 0.0
    %1176 = vmatpush1.msra.mxu0 0.0
    %1177 = vmatprep.subr.mxu0 0.0
    %1178 = vmatpush1.msra.mxu0 0.0
    %1179 = vmatprep.subr.mxu0 0.0
    %1180 = vmatpush1.msra.mxu0 0.0
    %1181 = vmatprep.subr.mxu0 0.0
    %1182 = vmatpush1.msra.mxu0 0.0
    %1183 = vmatprep.subr.mxu0 0.0
    %1184 = vmatpush1.msra.mxu0 0.0
    %1185 = vmatprep.subr.mxu0 0.0
    %1186 = vmatpush1.msra.mxu0 0.0
    %1187 = vmatprep.subr.mxu0 0.0
    %1188 = vmatpush1.msra.mxu0 0.0
    %1189 = vmatprep.subr.mxu0 0.0
    %1190 = vmatpush1.msra.mxu0 0.0
    %1191 = vmatprep.subr.mxu0 0.0
    %1192 = vmatpush1.msra.mxu0 0.0
    %1193 = vmatprep.subr.mxu0 %v80
    %1194 = vmatpush1.msra.mxu0 %v79
    %1195 = vmatprep.subr.mxu0 %v78
    %1196 = vmatpush1.msra.mxu0 %v77
    %1197 = vmatprep.subr.mxu0 %v76
    %1198 = vmatpush1.msra.mxu0 %v75
    %1199 = vmatprep.subr.mxu0 %v74
    %1200 = vmatpush1.msra.mxu0 %v73
    %1201 = vmatprep.subr.mxu0 %v72
    %1202 = vmatpush1.msra.mxu0 %v71
    %1203 = vmatprep.subr.mxu0 %v70
    %1204 = vmatpush1.msra.mxu0 %v69
    %1205 = vmatprep.subr.mxu0 0.0
    %1206 = vmatpush2.msra.mxu0 0.0
    %1207 = vmatprep.subr.mxu0 0.0
    %1208 = vmatpush2.msra.mxu0 0.0
    %1209 = vmatprep.subr.mxu0 0.0
    %1210 = vmatpush2.msra.mxu0 0.0
    %1211 = vmatprep.subr.mxu0 0.0
    %1212 = vmatpush2.msra.mxu0 0.0
    %1213 = vmatprep.subr.mxu0 0.0
    %1214 = vmatpush2.msra.mxu0 0.0
    %1215 = vmatprep.subr.mxu0 0.0
    %1216 = vmatpush2.msra.mxu0 0.0
    %1217 = vmatprep.subr.mxu0 0.0
    %1218 = vmatpush2.msra.mxu0 0.0
    %1219 = vmatprep.subr.mxu0 0.0
    %1220 = vmatpush2.msra.mxu0 0.0
    %1221 = vmatprep.subr.mxu0 0.0
    %1222 = vmatpush2.msra.mxu0 0.0
    %1223 = vmatprep.subr.mxu0 0.0
    %1224 = vmatpush2.msra.mxu0 0.0
    %1225 = vmatprep.subr.mxu0 0.0
    %1226 = vmatpush2.msra.mxu0 0.0
    %1227 = vmatprep.subr.mxu0 0.0
    %1228 = vmatpush2.msra.mxu0 0.0
    %1229 = vmatprep.subr.mxu0 0.0
    %1230 = vmatpush2.msra.mxu0 0.0
    %1231 = vmatprep.subr.mxu0 0.0
    %1232 = vmatpush2.msra.mxu0 0.0
    %1233 = vmatprep.subr.mxu0 0.0
    %1234 = vmatpush2.msra.mxu0 0.0
    %1235 = vmatprep.subr.mxu0 0.0
    %1236 = vmatpush2.msra.mxu0 0.0
    %1237 = vmatprep.mubr.f32.mxu0 0.0
    %1238 = vmatmul.mubr.f32.gmra.mxu0 %v1171
    %v1239 = vpop.f32.mrf.mxu0
    %v1240 = vadd.f32 0.0, %v1239
    %v1241 = vpop.f32.mrf.mxu0
    %v1242 = vadd.f32 0.0, %v1241
    %1243 = vdwg.mxu0
    %s1244 = scalar_lea.vmem [#allocation6], 10
    %v1245 = vld [vmem:[%s1244] sm:$0x3]
    %v1246 = vadd.f32 %v1245, %v1240
    %v1247 = vxor.u32 %v1246, 2147483648
    %v1248 = vmul.f32 %v1247, 1.442695
    %v1249 = vpow.pop %v1248
    %v1250 = vadd.f32 %v1249, 1.0
    %v1251 = vrcp.pop %v1250
    %v1252 = vmul.f32 1.0, %v1251
    %v1253 = vtanh.pop %v1246
    %v1254 = vmul.f32 %v1252, %v1052
    %1256 = vrot.lane.b32.xlu0 %v1253, 64
    %v1257 = vpop.permute.xlu0 %1256
    %v1259 = vmul.f32 %v1252, %v1257
    %1261 = vrot.lane.b32.xlu0 %v1259, 32
    %v1262 = vpop.permute.xlu0 %1261
    %v1264 = vadd.f32 %v1254, %v1262
    %v1265 = vtanh.pop %v1264
    %1267 = vrot.lane.b32.xlu0 %v1265, 64
    %v1268 = vpop.permute.xlu0 %1267
    %v1270 = vmul.f32 %v1252, %v1268
    %1272 = vrot.lane.b32.xlu0 %v1270, 32
    %v1273 = vpop.permute.xlu0 %1272
    %v1274 = vsel %vm94, %v1273, 0
    %1276 = vmatprep.subr.mxu0 0.0
    %1277 = vmatpush1.msra.mxu0 0.0
    %1278 = vmatprep.subr.mxu0 0.0
    %1279 = vmatpush1.msra.mxu0 0.0
    %1280 = vmatprep.subr.mxu0 0.0
    %1281 = vmatpush1.msra.mxu0 0.0
    %1282 = vmatprep.subr.mxu0 0.0
    %1283 = vmatpush1.msra.mxu0 0.0
    %1284 = vmatprep.subr.mxu0 0.0
    %1285 = vmatpush1.msra.mxu0 0.0
    %1286 = vmatprep.subr.mxu0 0.0
    %1287 = vmatpush1.msra.mxu0 0.0
    %1288 = vmatprep.subr.mxu0 0.0
    %1289 = vmatpush1.msra.mxu0 0.0
    %1290 = vmatprep.subr.mxu0 0.0
    %1291 = vmatpush1.msra.mxu0 0.0
    %1292 = vmatprep.subr.mxu0 0.0
    %1293 = vmatpush1.msra.mxu0 0.0
    %1294 = vmatprep.subr.mxu0 0.0
    %1295 = vmatpush1.msra.mxu0 0.0
    %1296 = vmatprep.subr.mxu0 0.0
    %1297 = vmatpush1.msra.mxu0 0.0
    %1298 = vmatprep.subr.mxu0 0.0
    %1299 = vmatpush1.msra.mxu0 0.0
    %1300 = vmatprep.subr.mxu0 0.0
    %1301 = vmatpush1.msra.mxu0 %v84
    %1302 = vmatprep.subr.mxu0 0.0
    %1303 = vmatpush1.msra.mxu0 %v83
    %1304 = vmatprep.subr.mxu0 0.0
    %1305 = vmatpush1.msra.mxu0 %v82
    %1306 = vmatprep.subr.mxu0 0.0
    %1307 = vmatpush1.msra.mxu0 %v81
    %1308 = vmatprep.subr.mxu0 0.0
    %1309 = vmatpush2.msra.mxu0 0.0
    %1310 = vmatprep.subr.mxu0 0.0
    %1311 = vmatpush2.msra.mxu0 0.0
    %1312 = vmatprep.subr.mxu0 0.0
    %1313 = vmatpush2.msra.mxu0 0.0
    %1314 = vmatprep.subr.mxu0 0.0
    %1315 = vmatpush2.msra.mxu0 0.0
    %1316 = vmatprep.subr.mxu0 0.0
    %1317 = vmatpush2.msra.mxu0 0.0
    %1318 = vmatprep.subr.mxu0 0.0
    %1319 = vmatpush2.msra.mxu0 0.0
    %1320 = vmatprep.subr.mxu0 0.0
    %1321 = vmatpush2.msra.mxu0 0.0
    %1322 = vmatprep.subr.mxu0 0.0
    %1323 = vmatpush2.msra.mxu0 0.0
    %1324 = vmatprep.subr.mxu0 0.0
    %1325 = vmatpush2.msra.mxu0 0.0
    %1326 = vmatprep.subr.mxu0 0.0
    %1327 = vmatpush2.msra.mxu0 0.0
    %1328 = vmatprep.subr.mxu0 0.0
    %1329 = vmatpush2.msra.mxu0 0.0
    %1330 = vmatprep.subr.mxu0 0.0
    %1331 = vmatpush2.msra.mxu0 0.0
    %1332 = vmatprep.subr.mxu0 0.0
    %1333 = vmatpush2.msra.mxu0 0.0
    %1334 = vmatprep.subr.mxu0 0.0
    %1335 = vmatpush2.msra.mxu0 0.0
    %1336 = vmatprep.subr.mxu0 0.0
    %1337 = vmatpush2.msra.mxu0 0.0
    %1338 = vmatprep.subr.mxu0 0.0
    %1339 = vmatpush2.msra.mxu0 0.0
    %1340 = vmatprep.mubr.f32.mxu0 0.0
    %1341 = vmatmul.mubr.f32.gmra.mxu0 %v1274
    %v1342 = vpop.f32.mrf.mxu0
    %v1343 = vadd.f32 %v1242, %v1342
    %v1344 = vpop.f32.mrf.mxu0
    %1345 = vdwg.mxu0
    %v1346 = vadd.f32 %v1343, %v280
    %v1347 = vxor.u32 %v1346, 2147483648
    %v1348 = vmul.f32 %v1347, 1.442695
    %v1349 = vpow.pop %v1348
    %v1350 = vadd.f32 %v1349, 1.0
    %v1351 = vrcp.pop %v1350
    %v1352 = vmul.f32 1.0, %v1351
    %v1353 = vtanh.pop %v1346
    %v1354 = vmul.f32 %v1352, %v1152
    %1356 = vrot.lane.b32.xlu0 %v1353, 96
    %v1357 = vpop.permute.xlu0 %1356
    %v1359 = vmul.f32 %v1352, %v1357
    %1361 = vrot.lane.b32.xlu0 %v1359, 16
    %v1362 = vpop.permute.xlu0 %1361
    %v1364 = vadd.f32 %v1354, %v1362
    %v1365 = vtanh.pop %v1364
    %1367 = vrot.lane.b32.xlu0 %v1365, 32
    %v1368 = vpop.permute.xlu0 %1367
    %v1370 = vmul.f32 %v1352, %v1368
    %1372 = vrot.lane.b32.xlu0 %v1370, 80
    %v1373 = vpop.permute.xlu0 %1372
    %s1375 = scalar_lea.vmem [#allocation12], 10
    %1376 = vst.msk [vmem:[%s1375] sm:$0x3] %vm315, %v1373
    %1378 = vrot.lane.b32.xlu0 %v1370, 112
    %v1379 = vpop.permute.xlu0 %1378
    %v1381 = vsel %vm94, %v1273, %v1379
    %v1383 = vsel %vm96, %v1381, 0
    %1385 = vmatprep.subr.mxu0 0.0
    %1386 = vmatpush1.msra.mxu0 0.0
    %1387 = vmatprep.subr.mxu0 0.0
    %1388 = vmatpush1.msra.mxu0 0.0
    %1389 = vmatprep.subr.mxu0 0.0
    %1390 = vmatpush1.msra.mxu0 0.0
    %1391 = vmatprep.subr.mxu0 0.0
    %1392 = vmatpush1.msra.mxu0 0.0
    %1393 = vmatprep.subr.mxu0 0.0
    %1394 = vmatpush1.msra.mxu0 0.0
    %1395 = vmatprep.subr.mxu0 0.0
    %1396 = vmatpush1.msra.mxu0 0.0
    %1397 = vmatprep.subr.mxu0 0.0
    %1398 = vmatpush1.msra.mxu0 0.0
    %1399 = vmatprep.subr.mxu0 0.0
    %1400 = vmatpush1.msra.mxu0 0.0
    %1401 = vmatprep.subr.mxu0 0.0
    %1402 = vmatpush1.msra.mxu0 0.0
    %1403 = vmatprep.subr.mxu0 0.0
    %1404 = vmatpush1.msra.mxu0 0.0
    %1405 = vmatprep.subr.mxu0 %v80
    %1406 = vmatpush1.msra.mxu0 %v79
    %1407 = vmatprep.subr.mxu0 %v78
    %1408 = vmatpush1.msra.mxu0 %v77
    %1409 = vmatprep.subr.mxu0 %v76
    %1410 = vmatpush1.msra.mxu0 %v75
    %1411 = vmatprep.subr.mxu0 %v74
    %1412 = vmatpush1.msra.mxu0 %v73
    %1413 = vmatprep.subr.mxu0 %v72
    %1414 = vmatpush1.msra.mxu0 %v71
    %1415 = vmatprep.subr.mxu0 %v70
    %1416 = vmatpush1.msra.mxu0 %v69
    %1417 = vmatprep.subr.mxu0 0.0
    %1418 = vmatpush2.msra.mxu0 0.0
    %1419 = vmatprep.subr.mxu0 0.0
    %1420 = vmatpush2.msra.mxu0 0.0
    %1421 = vmatprep.subr.mxu0 0.0
    %1422 = vmatpush2.msra.mxu0 0.0
    %1423 = vmatprep.subr.mxu0 0.0
    %1424 = vmatpush2.msra.mxu0 0.0
    %1425 = vmatprep.subr.mxu0 0.0
    %1426 = vmatpush2.msra.mxu0 0.0
    %1427 = vmatprep.subr.mxu0 0.0
    %1428 = vmatpush2.msra.mxu0 0.0
    %1429 = vmatprep.subr.mxu0 0.0
    %1430 = vmatpush2.msra.mxu0 0.0
    %1431 = vmatprep.subr.mxu0 0.0
    %1432 = vmatpush2.msra.mxu0 0.0
    %1433 = vmatprep.subr.mxu0 0.0
    %1434 = vmatpush2.msra.mxu0 0.0
    %1435 = vmatprep.subr.mxu0 0.0
    %1436 = vmatpush2.msra.mxu0 0.0
    %1437 = vmatprep.subr.mxu0 0.0
    %1438 = vmatpush2.msra.mxu0 0.0
    %1439 = vmatprep.subr.mxu0 0.0
    %1440 = vmatpush2.msra.mxu0 0.0
    %1441 = vmatprep.subr.mxu0 0.0
    %1442 = vmatpush2.msra.mxu0 0.0
    %1443 = vmatprep.subr.mxu0 0.0
    %1444 = vmatpush2.msra.mxu0 0.0
    %1445 = vmatprep.subr.mxu0 0.0
    %1446 = vmatpush2.msra.mxu0 0.0
    %1447 = vmatprep.subr.mxu0 0.0
    %1448 = vmatpush2.msra.mxu0 0.0
    %1449 = vmatprep.mubr.f32.mxu0 0.0
    %1450 = vmatmul.mubr.f32.gmra.mxu0 %v1383
    %v1451 = vpop.f32.mrf.mxu0
    %v1452 = vadd.f32 0.0, %v1451
    %v1453 = vpop.f32.mrf.mxu0
    %v1454 = vadd.f32 0.0, %v1453
    %1455 = vdwg.mxu0
    %s1456 = scalar_lea.vmem [#allocation6], 12
    %v1457 = vld [vmem:[%s1456] sm:$0x3]
    %v1458 = vadd.f32 %v1457, %v1452
    %v1459 = vxor.u32 %v1458, 2147483648
    %v1460 = vmul.f32 %v1459, 1.442695
    %v1461 = vpow.pop %v1460
    %v1462 = vadd.f32 %v1461, 1.0
    %v1463 = vrcp.pop %v1462
    %v1464 = vmul.f32 1.0, %v1463
    %v1465 = vtanh.pop %v1458
    %v1466 = vmul.f32 %v1464, %v1264
    %1468 = vrot.lane.b32.xlu0 %v1465, 64
    %v1469 = vpop.permute.xlu0 %1468
    %v1471 = vmul.f32 %v1464, %v1469
    %1473 = vrot.lane.b32.xlu0 %v1471, 32
    %v1474 = vpop.permute.xlu0 %1473
    %v1476 = vadd.f32 %v1466, %v1474
    %v1477 = vtanh.pop %v1476
    %1479 = vrot.lane.b32.xlu0 %v1477, 64
    %v1480 = vpop.permute.xlu0 %1479
    %v1482 = vmul.f32 %v1464, %v1480
    %1484 = vrot.lane.b32.xlu0 %v1482, 32
    %v1485 = vpop.permute.xlu0 %1484
    %v1486 = vsel %vm94, %v1485, 0
    %1488 = vmatprep.subr.mxu0 0.0
    %1489 = vmatpush1.msra.mxu0 0.0
    %1490 = vmatprep.subr.mxu0 0.0
    %1491 = vmatpush1.msra.mxu0 0.0
    %1492 = vmatprep.subr.mxu0 0.0
    %1493 = vmatpush1.msra.mxu0 0.0
    %1494 = vmatprep.subr.mxu0 0.0
    %1495 = vmatpush1.msra.mxu0 0.0
    %1496 = vmatprep.subr.mxu0 0.0
    %1497 = vmatpush1.msra.mxu0 0.0
    %1498 = vmatprep.subr.mxu0 0.0
    %1499 = vmatpush1.msra.mxu0 0.0
    %1500 = vmatprep.subr.mxu0 0.0
    %1501 = vmatpush1.msra.mxu0 0.0
    %1502 = vmatprep.subr.mxu0 0.0
    %1503 = vmatpush1.msra.mxu0 0.0
    %1504 = vmatprep.subr.mxu0 0.0
    %1505 = vmatpush1.msra.mxu0 0.0
    %1506 = vmatprep.subr.mxu0 0.0
    %1507 = vmatpush1.msra.mxu0 0.0
    %1508 = vmatprep.subr.mxu0 0.0
    %1509 = vmatpush1.msra.mxu0 0.0
    %1510 = vmatprep.subr.mxu0 0.0
    %1511 = vmatpush1.msra.mxu0 0.0
    %1512 = vmatprep.subr.mxu0 0.0
    %1513 = vmatpush1.msra.mxu0 %v84
    %1514 = vmatprep.subr.mxu0 0.0
    %1515 = vmatpush1.msra.mxu0 %v83
    %1516 = vmatprep.subr.mxu0 0.0
    %1517 = vmatpush1.msra.mxu0 %v82
    %1518 = vmatprep.subr.mxu0 0.0
    %1519 = vmatpush1.msra.mxu0 %v81
    %1520 = vmatprep.subr.mxu0 0.0
    %1521 = vmatpush2.msra.mxu0 0.0
    %1522 = vmatprep.subr.mxu0 0.0
    %1523 = vmatpush2.msra.mxu0 0.0
    %1524 = vmatprep.subr.mxu0 0.0
    %1525 = vmatpush2.msra.mxu0 0.0
    %1526 = vmatprep.subr.mxu0 0.0
    %1527 = vmatpush2.msra.mxu0 0.0
    %1528 = vmatprep.subr.mxu0 0.0
    %1529 = vmatpush2.msra.mxu0 0.0
    %1530 = vmatprep.subr.mxu0 0.0
    %1531 = vmatpush2.msra.mxu0 0.0
    %1532 = vmatprep.subr.mxu0 0.0
    %1533 = vmatpush2.msra.mxu0 0.0
    %1534 = vmatprep.subr.mxu0 0.0
    %1535 = vmatpush2.msra.mxu0 0.0
    %1536 = vmatprep.subr.mxu0 0.0
    %1537 = vmatpush2.msra.mxu0 0.0
    %1538 = vmatprep.subr.mxu0 0.0
    %1539 = vmatpush2.msra.mxu0 0.0
    %1540 = vmatprep.subr.mxu0 0.0
    %1541 = vmatpush2.msra.mxu0 0.0
    %1542 = vmatprep.subr.mxu0 0.0
    %1543 = vmatpush2.msra.mxu0 0.0
    %1544 = vmatprep.subr.mxu0 0.0
    %1545 = vmatpush2.msra.mxu0 0.0
    %1546 = vmatprep.subr.mxu0 0.0
    %1547 = vmatpush2.msra.mxu0 0.0
    %1548 = vmatprep.subr.mxu0 0.0
    %1549 = vmatpush2.msra.mxu0 0.0
    %1550 = vmatprep.subr.mxu0 0.0
    %1551 = vmatpush2.msra.mxu0 0.0
    %1552 = vmatprep.mubr.f32.mxu0 0.0
    %1553 = vmatmul.mubr.f32.gmra.mxu0 %v1486
    %v1554 = vpop.f32.mrf.mxu0
    %v1555 = vadd.f32 %v1454, %v1554
    %v1556 = vpop.f32.mrf.mxu0
    %1557 = vdwg.mxu0
    %v1558 = vadd.f32 %v1555, %v280
    %v1559 = vxor.u32 %v1558, 2147483648
    %v1560 = vmul.f32 %v1559, 1.442695
    %v1561 = vpow.pop %v1560
    %v1562 = vadd.f32 %v1561, 1.0
    %v1563 = vrcp.pop %v1562
    %v1564 = vmul.f32 1.0, %v1563
    %v1565 = vtanh.pop %v1558
    %v1566 = vmul.f32 %v1564, %v1364
    %1568 = vrot.lane.b32.xlu0 %v1565, 96
    %v1569 = vpop.permute.xlu0 %1568
    %v1571 = vmul.f32 %v1564, %v1569
    %1573 = vrot.lane.b32.xlu0 %v1571, 16
    %v1574 = vpop.permute.xlu0 %1573
    %v1576 = vadd.f32 %v1566, %v1574
    %v1577 = vtanh.pop %v1576
    %1579 = vrot.lane.b32.xlu0 %v1577, 32
    %v1580 = vpop.permute.xlu0 %1579
    %v1582 = vmul.f32 %v1564, %v1580
    %1584 = vrot.lane.b32.xlu0 %v1582, 80
    %v1585 = vpop.permute.xlu0 %1584
    %s1587 = scalar_lea.vmem [#allocation12], 12
    %1588 = vst.msk [vmem:[%s1587] sm:$0x3] %vm315, %v1585
    %1590 = vrot.lane.b32.xlu0 %v1582, 112
    %v1591 = vpop.permute.xlu0 %1590
    %v1593 = vsel %vm94, %v1485, %v1591
    %v1595 = vsel %vm96, %v1593, 0
    %1597 = vmatprep.subr.mxu0 0.0
    %1598 = vmatpush1.msra.mxu0 0.0
    %1599 = vmatprep.subr.mxu0 0.0
    %1600 = vmatpush1.msra.mxu0 0.0
    %1601 = vmatprep.subr.mxu0 0.0
    %1602 = vmatpush1.msra.mxu0 0.0
    %1603 = vmatprep.subr.mxu0 0.0
    %1604 = vmatpush1.msra.mxu0 0.0
    %1605 = vmatprep.subr.mxu0 0.0
    %1606 = vmatpush1.msra.mxu0 0.0
    %1607 = vmatprep.subr.mxu0 0.0
    %1608 = vmatpush1.msra.mxu0 0.0
    %1609 = vmatprep.subr.mxu0 0.0
    %1610 = vmatpush1.msra.mxu0 0.0
    %1611 = vmatprep.subr.mxu0 0.0
    %1612 = vmatpush1.msra.mxu0 0.0
    %1613 = vmatprep.subr.mxu0 0.0
    %1614 = vmatpush1.msra.mxu0 0.0
    %1615 = vmatprep.subr.mxu0 0.0
    %1616 = vmatpush1.msra.mxu0 0.0
    %1617 = vmatprep.subr.mxu0 %v80
    %1618 = vmatpush1.msra.mxu0 %v79
    %1619 = vmatprep.subr.mxu0 %v78
    %1620 = vmatpush1.msra.mxu0 %v77
    %1621 = vmatprep.subr.mxu0 %v76
    %1622 = vmatpush1.msra.mxu0 %v75
    %1623 = vmatprep.subr.mxu0 %v74
    %1624 = vmatpush1.msra.mxu0 %v73
    %1625 = vmatprep.subr.mxu0 %v72
    %1626 = vmatpush1.msra.mxu0 %v71
    %1627 = vmatprep.subr.mxu0 %v70
    %1628 = vmatpush1.msra.mxu0 %v69
    %1629 = vmatprep.subr.mxu0 0.0
    %1630 = vmatpush2.msra.mxu0 0.0
    %1631 = vmatprep.subr.mxu0 0.0
    %1632 = vmatpush2.msra.mxu0 0.0
    %1633 = vmatprep.subr.mxu0 0.0
    %1634 = vmatpush2.msra.mxu0 0.0
    %1635 = vmatprep.subr.mxu0 0.0
    %1636 = vmatpush2.msra.mxu0 0.0
    %1637 = vmatprep.subr.mxu0 0.0
    %1638 = vmatpush2.msra.mxu0 0.0
    %1639 = vmatprep.subr.mxu0 0.0
    %1640 = vmatpush2.msra.mxu0 0.0
    %1641 = vmatprep.subr.mxu0 0.0
    %1642 = vmatpush2.msra.mxu0 0.0
    %1643 = vmatprep.subr.mxu0 0.0
    %1644 = vmatpush2.msra.mxu0 0.0
    %1645 = vmatprep.subr.mxu0 0.0
    %1646 = vmatpush2.msra.mxu0 0.0
    %1647 = vmatprep.subr.mxu0 0.0
    %1648 = vmatpush2.msra.mxu0 0.0
    %1649 = vmatprep.subr.mxu0 0.0
    %1650 = vmatpush2.msra.mxu0 0.0
    %1651 = vmatprep.subr.mxu0 0.0
    %1652 = vmatpush2.msra.mxu0 0.0
    %1653 = vmatprep.subr.mxu0 0.0
    %1654 = vmatpush2.msra.mxu0 0.0
    %1655 = vmatprep.subr.mxu0 0.0
    %1656 = vmatpush2.msra.mxu0 0.0
    %1657 = vmatprep.subr.mxu0 0.0
    %1658 = vmatpush2.msra.mxu0 0.0
    %1659 = vmatprep.subr.mxu0 0.0
    %1660 = vmatpush2.msra.mxu0 0.0
    %1661 = vmatprep.mubr.f32.mxu0 0.0
    %1662 = vmatmul.mubr.f32.gmra.mxu0 %v1595
    %v1663 = vpop.f32.mrf.mxu0
    %v1664 = vadd.f32 0.0, %v1663
    %v1665 = vpop.f32.mrf.mxu0
    %v1666 = vadd.f32 0.0, %v1665
    %1667 = vdwg.mxu0
    %s1668 = scalar_lea.vmem [#allocation6], 14
    %v1669 = vld [vmem:[%s1668] sm:$0x3]
    %v1670 = vadd.f32 %v1669, %v1664
    %v1671 = vxor.u32 %v1670, 2147483648
    %v1672 = vmul.f32 %v1671, 1.442695
    %v1673 = vpow.pop %v1672
    %v1674 = vadd.f32 %v1673, 1.0
    %v1675 = vrcp.pop %v1674
    %v1676 = vmul.f32 1.0, %v1675
    %v1677 = vtanh.pop %v1670
    %v1678 = vmul.f32 %v1676, %v1476
    %1680 = vrot.lane.b32.xlu0 %v1677, 64
    %v1681 = vpop.permute.xlu0 %1680
    %v1683 = vmul.f32 %v1676, %v1681
    %1685 = vrot.lane.b32.xlu0 %v1683, 32
    %v1686 = vpop.permute.xlu0 %1685
    %v1688 = vadd.f32 %v1678, %v1686
    %v1689 = vtanh.pop %v1688
    %1691 = vrot.lane.b32.xlu0 %v1689, 64
    %v1692 = vpop.permute.xlu0 %1691
    %v1694 = vmul.f32 %v1676, %v1692
    %1696 = vrot.lane.b32.xlu0 %v1694, 32
    %v1697 = vpop.permute.xlu0 %1696
    %v1698 = vsel %vm94, %v1697, 0
    %1700 = vmatprep.subr.mxu0 0.0
    %1701 = vmatpush1.msra.mxu0 0.0
    %1702 = vmatprep.subr.mxu0 0.0
    %1703 = vmatpush1.msra.mxu0 0.0
    %1704 = vmatprep.subr.mxu0 0.0
    %1705 = vmatpush1.msra.mxu0 0.0
    %1706 = vmatprep.subr.mxu0 0.0
    %1707 = vmatpush1.msra.mxu0 0.0
    %1708 = vmatprep.subr.mxu0 0.0
    %1709 = vmatpush1.msra.mxu0 0.0
    %1710 = vmatprep.subr.mxu0 0.0
    %1711 = vmatpush1.msra.mxu0 0.0
    %1712 = vmatprep.subr.mxu0 0.0
    %1713 = vmatpush1.msra.mxu0 0.0
    %1714 = vmatprep.subr.mxu0 0.0
    %1715 = vmatpush1.msra.mxu0 0.0
    %1716 = vmatprep.subr.mxu0 0.0
    %1717 = vmatpush1.msra.mxu0 0.0
    %1718 = vmatprep.subr.mxu0 0.0
    %1719 = vmatpush1.msra.mxu0 0.0
    %1720 = vmatprep.subr.mxu0 0.0
    %1721 = vmatpush1.msra.mxu0 0.0
    %1722 = vmatprep.subr.mxu0 0.0
    %1723 = vmatpush1.msra.mxu0 0.0
    %1724 = vmatprep.subr.mxu0 0.0
    %1725 = vmatpush1.msra.mxu0 %v84
    %1726 = vmatprep.subr.mxu0 0.0
    %1727 = vmatpush1.msra.mxu0 %v83
    %1728 = vmatprep.subr.mxu0 0.0
    %1729 = vmatpush1.msra.mxu0 %v82
    %1730 = vmatprep.subr.mxu0 0.0
    %1731 = vmatpush1.msra.mxu0 %v81
    %1732 = vmatprep.subr.mxu0 0.0
    %1733 = vmatpush2.msra.mxu0 0.0
    %1734 = vmatprep.subr.mxu0 0.0
    %1735 = vmatpush2.msra.mxu0 0.0
    %1736 = vmatprep.subr.mxu0 0.0
    %1737 = vmatpush2.msra.mxu0 0.0
    %1738 = vmatprep.subr.mxu0 0.0
    %1739 = vmatpush2.msra.mxu0 0.0
    %1740 = vmatprep.subr.mxu0 0.0
    %1741 = vmatpush2.msra.mxu0 0.0
    %1742 = vmatprep.subr.mxu0 0.0
    %1743 = vmatpush2.msra.mxu0 0.0
    %1744 = vmatprep.subr.mxu0 0.0
    %1745 = vmatpush2.msra.mxu0 0.0
    %1746 = vmatprep.subr.mxu0 0.0
    %1747 = vmatpush2.msra.mxu0 0.0
    %1748 = vmatprep.subr.mxu0 0.0
    %1749 = vmatpush2.msra.mxu0 0.0
    %1750 = vmatprep.subr.mxu0 0.0
    %1751 = vmatpush2.msra.mxu0 0.0
    %1752 = vmatprep.subr.mxu0 0.0
    %1753 = vmatpush2.msra.mxu0 0.0
    %1754 = vmatprep.subr.mxu0 0.0
    %1755 = vmatpush2.msra.mxu0 0.0
    %1756 = vmatprep.subr.mxu0 0.0
    %1757 = vmatpush2.msra.mxu0 0.0
    %1758 = vmatprep.subr.mxu0 0.0
    %1759 = vmatpush2.msra.mxu0 0.0
    %1760 = vmatprep.subr.mxu0 0.0
    %1761 = vmatpush2.msra.mxu0 0.0
    %1762 = vmatprep.subr.mxu0 0.0
    %1763 = vmatpush2.msra.mxu0 0.0
    %1764 = vmatprep.mubr.f32.mxu0 0.0
    %1765 = vmatmul.mubr.f32.gmra.mxu0 %v1698
    %v1766 = vpop.f32.mrf.mxu0
    %v1767 = vadd.f32 %v1666, %v1766
    %v1768 = vpop.f32.mrf.mxu0
    %1769 = vdwg.mxu0
    %v1770 = vadd.f32 %v1767, %v280
    %v1771 = vxor.u32 %v1770, 2147483648
    %v1772 = vmul.f32 %v1771, 1.442695
    %v1773 = vpow.pop %v1772
    %v1774 = vadd.f32 %v1773, 1.0
    %v1775 = vrcp.pop %v1774
    %v1776 = vmul.f32 1.0, %v1775
    %v1777 = vtanh.pop %v1770
    %v1778 = vmul.f32 %v1776, %v1576
    %1780 = vrot.lane.b32.xlu0 %v1777, 96
    %v1781 = vpop.permute.xlu0 %1780
    %v1783 = vmul.f32 %v1776, %v1781
    %1785 = vrot.lane.b32.xlu0 %v1783, 16
    %v1786 = vpop.permute.xlu0 %1785
    %v1788 = vadd.f32 %v1778, %v1786
    %v1789 = vtanh.pop %v1788
    %1791 = vrot.lane.b32.xlu0 %v1789, 32
    %v1792 = vpop.permute.xlu0 %1791
    %v1794 = vmul.f32 %v1776, %v1792
    %1796 = vrot.lane.b32.xlu0 %v1794, 80
    %v1797 = vpop.permute.xlu0 %1796
    %s1799 = scalar_lea.vmem [#allocation12], 14
    %1800 = vst.msk [vmem:[%s1799] sm:$0x3] %vm315, %v1797
    %vm1802 = vcmask 254976
    %1803 = vst.msk [vmem:[#allocation2] sm:$0x3] %vm1802, %v1697
    %1805 = vrot.lane.b32.xlu0 %v1688, 96
    %v1806 = vpop.permute.xlu0 %1805
    %1808 = vst.msk [vmem:[#allocation3] sm:$0x3] %vm1802, %v1806
    %1809 = vst.msk [vmem:[#allocation4] sm:$0x3] %vm315, %v1797
    %1811 = vrot.lane.b32.xlu0 %v1788, 112
    %v1812 = vpop.permute.xlu0 %1811
    %1814 = vst.msk [vmem:[#allocation5] sm:$0x3] %vm315, %v1812
    // Predicated region
    $region34: #{tpu_custom_call.1} parent=1 // pred_check
      _
    $region35: #{tpu_custom_call.1} parent=1 // pred_check_branch
      %1816 = sbr.rel (0) target = $region37
    $region36: #{tpu_custom_call.1} parent=1 // pred_region
      %s1818 = ssub.s32 256, 256
      %1819 = vsyncadd [#allocation8], %s1818
      %s1820 = sshll.u32 [#allocation12], 4
      %s1821 = int_to_ptr.vmem [resolvable:$true] %s1820
      %1826 = dma.vmem_to_hbm [thread:$0]  %s1821, 256, %s4, [#allocation8], 32, 32, 2
    $region37: #{tpu_custom_call.1} parent=1 // pred_fallthru
      _
    // Predicated region
    $region38: #{tpu_custom_call.1} parent=1 // pred_check
      _
    $region39: #{tpu_custom_call.1} parent=1 // pred_check_branch
      %1828 = sbr.rel (0) target = $region41
    $region40: #{tpu_custom_call.1} parent=1 // pred_region
      %1829 = dma.done [#allocation8], 256
    $region41: #{tpu_custom_call.1} parent=1 // pred_fallthru
      _
    %1830 = vsyncpa [#allocation7], 1
    %1831 = vsyncpa [#allocation10], 1
    %1832 = vsyncpa [#allocation8], 1

</llo_original>
